<compile_context>
chip_gen: v7x
topology: tpu7x:2x2x1
jax: 0.10.0
libtpu: 0.0.40
codegen_flags: <defaults>
</compile_context>

<pallas_src>
import functools

import jax
import jax.numpy as jnp
from jax import lax
from jax.experimental import pallas as pl
from jax.experimental.pallas import tpu as pltpu

LANE = 128
SUBLANE = 8


def _round_up(x, m):
    return (x + m - 1) // m * m


def _tpu_cores_and_vmem():
    """Best-effort (#TensorCores sharing the grid, per-core VMEM bytes)."""
    n_cores = 1
    vmem_cap = 64 * 1024 * 1024          # conservative (v7x-sized) fallback
    try:
        kind = jax.devices()[0].device_kind.lower()
        if "v7" in kind or "7x" in kind:
            n_cores = 2                  # v7x: 2 TC/chip; v5e/v6e: 1 TC/chip
    except Exception:
        pass
    try:
        vmem_cap = int(pltpu.get_tpu_info().vmem_capacity_bytes)
    except Exception:
        pass
    return n_cores, vmem_cap


def char_cnn_kernel(ids_ref, tbl_ref, b_ref, out_ref, *, kw, vp, l_out):
    """One batch tile of the fused embed + conv + maxpool.

    ids_ref: (TB*Lpp, kw) int32  per-tap pre-shifted char ids; -1 == padding
    tbl_ref: (kw*Vp, Cp)  bf16   stacked-K fused (embedding @ conv-weight) table
    b_ref:   (1, Cp)      f32    conv bias
    out_ref: (TB, Cp)     f32    max-pooled conv features (lane-dense)
    """
    M = ids_ref.shape[0]
    TB, Cp = out_ref.shape
    Lpp = M // TB

    ids = ids_ref[...]                                    # (M, kw)

    # Single-row lane iota; the == broadcasts it over sublanes (no (M, Vp)
    # iota materialization).  id == -1 matches no lane -> all-zero row, which
    # reproduces Conv2d's zero padding / every other kind of padding.
    iota = lax.broadcasted_iota(jnp.int32, (1, vp), 1)    # (1, Vp)

    # Stacked-K one-hot: lane segment k is the one-hot of the tap-k shifted
    # ids.  Each piece is exactly 128 lanes wide -> the concat is lane-aligned
    # vreg placement (no relayout).
    parts = [(iota == ids[:, k:k + 1]).astype(tbl_ref.dtype) for k in range(kw)]
    onehot = jnp.concatenate(parts, axis=1) if kw > 1 else parts[0]  # (M, kw*Vp)

    # ONE MXU pass with K = kw*Vp (full depth on the 256-wide v6e/v7x MXU).
    # Result is only (M, Cp) f32 -- kw x less post-matmul VMEM traffic than the
    # old (M, kw*Cp) layout, and no misaligned sublane tap slices afterwards.
    z = jnp.dot(onehot, tbl_ref[...],
                preferred_element_type=jnp.float32)       # (M, Cp)
    z = z.reshape(TB, Lpp, Cp)     # clean retile: Lpp % 8 == 0, Cp % 128 == 0

    # Max-pool over the l_out valid conv positions, then bias (constant over
    # L: max(x + b) == max(x) + b).  Rows l >= l_out hold tap-overhang garbage
    # and are excluded by the slice.
    out_ref[...] = (jnp.max(z[:, :l_out, :], axis=1)
                    + b_ref[...]).astype(out_ref.dtype)


def char_encoder_cnn(input_ids, emb_table, conv_w, conv_b, pad_width, *,
                     block_b=None):
    """CharEncoderCNN.forward (dropout p=0) for int char ids of shape (B, L).

    NOTE: assumes real char ids lie in [0, V); any negative / out-of-range id
    is treated as padding (zero embedding row), matching how -1 is used here.
    """
    B, L = input_ids.shape
    V, E = emb_table.shape
    C_out, _, kw, _ = conv_w.shape

    Lp = L + 2 * pad_width              # conv input length (PyTorch zero pad)
    l_out = Lp - kw + 1                 # conv output length == max-pool window
    assert l_out >= 1, "kernel_width too large for padded sequence"
    Lpp = _round_up(Lp, SUBLANE)        # sublane-aligned sequence length
    Vp = _round_up(V, LANE)             # lane-aligned per-tap K segment
    Cp = _round_up(C_out, LANE)         # lane-dense N -> unmasked output stores

    # ---- generation-aware batch tiling -------------------------------------
    n_cores, vmem_cap = _tpu_cores_and_vmem()
    vmem_limit = min(vmem_cap // 2, 64 * 1024 * 1024)  # requested scoped limit
    budget = vmem_limit // 2                           # headroom for compiler

    # Per-tile VMEM estimate: grid-constant operands (double-buffered table +
    # bias) are "fixed"; everything else scales with block_b rows.
    fixed = kw * Vp * Cp * 2 * 2 + Cp * 4 * 2 + 4096
    per_row = (Lpp * LANE * 4 * 2        # ids block (lane-padded), 2 buffers
               + Lpp * kw * Vp * 2       # bf16 stacked one-hot
               + Lpp * Cp * 4            # f32 matmul result
               + Cp * 4 * 2)             # pooled output, 2 buffers
    avail = max(budget - fixed, per_row)
    cap_rows = max(SUBLANE, (avail // per_row) // SUBLANE * SUBLANE)

    if block_b is None:
        if n_cores > 1:
            # v7x: >= n_cores equal grid steps so both TensorCores get work.
            want = _round_up(pl.cdiv(B, n_cores), SUBLANE)
        else:
            # v5e/v6e: grid steps are a serial loop -> one big step if it fits.
            want = _round_up(B, SUBLANE)
        block_b = min(want, cap_rows)
    block_b = max(SUBLANE, _round_up(block_b, SUBLANE))
    B_pad = _round_up(B, block_b)
    grid = (B_pad // block_b,)

    # ---- host-side prep (tiny: weights + int ids only) ---------------------
    # Fold Embedding and Conv2d (both linear in the one-hot ids), stacked
    # along K:  fused[k*Vp + v, c] = sum_e emb[v, e] * conv_w[c, 0, k, e]
    w_taps = jnp.transpose(conv_w[:, 0, :, :], (1, 2, 0)).astype(jnp.float32)  # (kw,E,C)
    fused = jnp.einsum('ve,kec->kvc', emb_table.astype(jnp.float32), w_taps)   # (kw,V,C)
    fused = jnp.pad(fused, ((0, 0), (0, Vp - V), (0, Cp - C_out)))             # (kw,Vp,Cp)
    fused = fused.reshape(kw * Vp, Cp).astype(jnp.bfloat16)
    bias = jnp.pad(conv_b.astype(jnp.float32), (0, Cp - C_out)).reshape(1, Cp)

    # ids: conv zero-padding + alignment/batch padding, all encoded as -1;
    # then pre-shift per conv tap so the kernel needs no rolls / misaligned
    # slices:  ids_sh[b, l, k] = padded_id[b, l + k]  (or -1 past the end).
    ids_padded = jnp.pad(input_ids.astype(jnp.int32),
                         ((0, B_pad - B), (pad_width, Lpp - Lp + pad_width)),
                         constant_values=-1)                    # (B_pad, Lpp)
    taps = [jnp.pad(ids_padded[:, k:], ((0, 0), (0, k)), constant_values=-1)
            for k in range(kw)]
    ids_sh = jnp.stack(taps, axis=-1).reshape(B_pad * Lpp, kw)  # (B_pad*Lpp, kw)
    # NOTE: this block uses kw of 128 VMEM lanes per row (intentional): the
    # ids are tiny and a lane-dense relayout in-kernel would cost more.

    cost = pl.CostEstimate(
        flops=2 * B_pad * Lpp * (kw * Vp) * Cp,
        transcendentals=0,
        bytes_accessed=ids_sh.size * 4 + fused.size * 2 + bias.size * 4
        + B_pad * Cp * 4,
    )

    out = pl.pallas_call(
        functools.partial(char_cnn_kernel, kw=kw, vp=Vp, l_out=l_out),
        out_shape=jax.ShapeDtypeStruct((B_pad, Cp), jnp.float32),
        grid_spec=pltpu.PrefetchScalarGridSpec(
            num_scalar_prefetch=0,
            grid=grid,
            in_specs=[
                pl.BlockSpec((block_b * Lpp, kw), lambda i: (i, 0)),
                pl.BlockSpec((kw * Vp, Cp), lambda i: (0, 0)),   # grid-constant
                pl.BlockSpec((1, Cp), lambda i: (0, 0)),         # grid-constant
            ],
            out_specs=pl.BlockSpec((block_b, Cp), lambda i: (i, 0)),
        ),
        compiler_params=pltpu.CompilerParams(
            dimension_semantics=("parallel",),
            vmem_limit_bytes=vmem_limit),
        cost_estimate=cost,
    )(ids_sh, fused, bias)

    return out[:B, :C_out]


def ref_forward(input_ids, emb_table, conv_w, conv_b, pad_width):
    # Pure-JAX f32 reference mirroring the PyTorch forward.
    emb = emb_table[input_ids].astype(jnp.float32)
    emb = jnp.pad(emb, ((0, 0), (pad_width, pad_width), (0, 0)))
    C_out, _, kw, _ = conv_w.shape
    Lp = emb.shape[1]
    L_out = Lp - kw + 1
    conv = jnp.zeros((emb.shape[0], L_out, C_out), jnp.float32)
    for k in range(kw):
        conv = conv + jnp.einsum('ble,ce->blc',
                                 emb[:, k:k + L_out, :],
                                 conv_w[:, 0, k, :].astype(jnp.float32))
    conv = conv + conv_b[None, None, :].astype(jnp.float32)
    return jnp.max(conv, axis=1)


if __name__ == "__main__":
    # Module hyperparameters (small, shapes consistent with CharEncoderCNN)
    vocab_size = 50
    embedding_size = 32
    out_channels = 64
    kernel_width = 3
    pad_width = 1
    B, L = 16, 16          # (num_words, max_word_len)

    key = jax.random.PRNGKey(0)
    k_ids, k_emb, k_w, k_b = jax.random.split(key, 4)

    input_ids = jax.random.randint(k_ids, (B, L), 0, vocab_size, dtype=jnp.int32)
    emb_table = jax.random.normal(k_emb, (vocab_size, embedding_size), jnp.float32)
    conv_w = 0.1 * jax.random.normal(
        k_w, (out_channels, 1, kernel_width, embedding_size), jnp.float32)
    conv_b = 0.1 * jax.random.normal(k_b, (out_channels,), jnp.float32)

    out = char_encoder_cnn(input_ids, emb_table, conv_w, conv_b, pad_width)
    out = jax.block_until_ready(out)

    ref = ref_forward(input_ids, emb_table, conv_w, conv_b, pad_width)
    assert out.shape == (B, out_channels), out.shape
    # bf16 fused table on the MXU -> loosen tolerance vs. the f32 reference.
    err = float(jnp.max(jnp.abs(out - ref)))
    assert jnp.allclose(out, ref, atol=2e-2, rtol=2e-2), err

    print("KERNEL_OK")
</pallas_src>

<mosaic_0001>
module attributes {stable_mosaic.version = 11 : i64} {
  func.func @char_cnn_kernel(%arg0: i32, %arg1: memref<384x3xi32, #tpu.memory_space<vmem>>, %arg2: memref<384x128xbf16, #tpu.memory_space<vmem>>, %arg3: memref<1x128xf32, #tpu.memory_space<vmem>>, %arg4: memref<16x128xf32, #tpu.memory_space<vmem>>) attributes {dimension_semantics = [#tpu.dimension_semantics<parallel>], iteration_bounds = array<i64: 1>, scalar_prefetch = 0 : i64, scratch_operands = 0 : i64, tpu.core_type = #tpu.core_type<tc>, window_params = [{transform_indices = @transform_0, window_bounds = array<i64: 384, 3>}, {pipeline_mode = #tpu.pipeline_mode<synchronous>, transform_indices = @transform_1, window_bounds = array<i64: 384, 128>}, {pipeline_mode = #tpu.pipeline_mode<synchronous>, transform_indices = @transform_2, window_bounds = array<i64: 1, 128>}, {transform_indices = @transform_3, window_bounds = array<i64: 16, 128>}]} {
    %c0 = arith.constant 0 : index
    %c0_0 = arith.constant 0 : index
    %0 = vector.load %arg1[%c0, %c0_0] : memref<384x3xi32, #tpu.memory_space<vmem>>, vector<384x3xi32>
    %1 = tpu.iota {dimensions = array<i32: 1>} : vector<1x128xi32>
    %2 = vector.extract_strided_slice %0 {offsets = [0, 0], sizes = [384, 1], strides = [1, 1]} : vector<384x3xi32> to vector<384x1xi32>
    %3 = vector.broadcast %1 : vector<1x128xi32> to vector<384x128xi32>
    %4 = vector.broadcast %2 : vector<384x1xi32> to vector<384x128xi32>
    %5 = arith.cmpi eq, %3, %4 : vector<384x128xi32>
    %6 = arith.extui %5 : vector<384x128xi1> to vector<384x128xi32>
    %7 = arith.sitofp %6 : vector<384x128xi32> to vector<384x128xf32>
    %8 = arith.truncf %7 : vector<384x128xf32> to vector<384x128xbf16>
    %9 = vector.extract_strided_slice %0 {offsets = [0, 1], sizes = [384, 1], strides = [1, 1]} : vector<384x3xi32> to vector<384x1xi32>
    %10 = vector.broadcast %1 : vector<1x128xi32> to vector<384x128xi32>
    %11 = vector.broadcast %9 : vector<384x1xi32> to vector<384x128xi32>
    %12 = arith.cmpi eq, %10, %11 : vector<384x128xi32>
    %13 = arith.extui %12 : vector<384x128xi1> to vector<384x128xi32>
    %14 = arith.sitofp %13 : vector<384x128xi32> to vector<384x128xf32>
    %15 = arith.truncf %14 : vector<384x128xf32> to vector<384x128xbf16>
    %16 = vector.extract_strided_slice %0 {offsets = [0, 2], sizes = [384, 1], strides = [1, 1]} : vector<384x3xi32> to vector<384x1xi32>
    %17 = vector.broadcast %1 : vector<1x128xi32> to vector<384x128xi32>
    %18 = vector.broadcast %16 : vector<384x1xi32> to vector<384x128xi32>
    %19 = arith.cmpi eq, %17, %18 : vector<384x128xi32>
    %20 = arith.extui %19 : vector<384x128xi1> to vector<384x128xi32>
    %21 = arith.sitofp %20 : vector<384x128xi32> to vector<384x128xf32>
    %22 = arith.truncf %21 : vector<384x128xf32> to vector<384x128xbf16>
    %23 = tpu.concatenate %8, %15, %22 in 1 : vector<384x128xbf16>, vector<384x128xbf16>, vector<384x128xbf16> -> vector<384x384xbf16>
    %c0_1 = arith.constant 0 : index
    %c0_2 = arith.constant 0 : index
    %24 = vector.load %arg2[%c0_1, %c0_2] : memref<384x128xbf16, #tpu.memory_space<vmem>>, vector<384x128xbf16>
    %cst = arith.constant dense<0.000000e+00> : vector<384x128xf32>
    %25 = tpu.matmul %23, %24, %cst {dimension_numbers = #tpu.dot_dimension_numbers<[1], [0], [0], [1], [0, 0, 1, 1], [], []>} : vector<384x384xbf16>, vector<384x128xbf16>, vector<384x128xf32> -> vector<384x128xf32>
    %26 = vector.shape_cast %25 : vector<384x128xf32> to vector<16x24x128xf32>
    %27 = vector.extract_strided_slice %26 {offsets = [0, 0, 0], sizes = [16, 16, 128], strides = [1, 1, 1]} : vector<16x24x128xf32> to vector<16x16x128xf32>
    %cst_3 = arith.constant dense<0xFF800000> : vector<16x128xf32>
    %28 = vector.multi_reduction <maximumf>, %27, %cst_3 [1] : vector<16x16x128xf32> to vector<16x128xf32>
    %c0_4 = arith.constant 0 : index
    %c0_5 = arith.constant 0 : index
    %29 = vector.load %arg3[%c0_4, %c0_5] : memref<1x128xf32, #tpu.memory_space<vmem>>, vector<1x128xf32>
    %30 = vector.broadcast %29 : vector<1x128xf32> to vector<16x128xf32>
    %31 = arith.addf %28, %30 : vector<16x128xf32>
    %c0_6 = arith.constant 0 : index
    %c0_7 = arith.constant 0 : index
    %32 = vector.load %arg4[%c0_6, %c0_7] : memref<16x128xf32, #tpu.memory_space<vmem>>, vector<16x128xf32>
    tpu.vector_store %arg4[%c0_6, %c0_7], %31 {strides = array<i32>} : memref<16x128xf32, #tpu.memory_space<vmem>>, vector<16x128xf32>,
    return
  }
  func.func @transform_0(%arg0: i32) -> (i32, i32) {
    %c0_i32 = arith.constant 0 : i32
    %c0_i32_0 = arith.constant 0 : i32
    return %arg0, %c0_i32 : i32, i32
  }
  func.func @transform_1(%arg0: i32) -> (i32, i32) {
    %c0_i32 = arith.constant 0 : i32
    %c0_i32_0 = arith.constant 0 : i32
    %c0_i32_1 = arith.constant 0 : i32
    return %c0_i32, %c0_i32_0 : i32, i32
  }
  func.func @transform_2(%arg0: i32) -> (i32, i32) {
    %c0_i32 = arith.constant 0 : i32
    %c0_i32_0 = arith.constant 0 : i32
    %c0_i32_1 = arith.constant 0 : i32
    return %c0_i32, %c0_i32_0 : i32, i32
  }
  func.func @transform_3(%arg0: i32) -> (i32, i32) {
    %c0_i32 = arith.constant 0 : i32
    %c0_i32_0 = arith.constant 0 : i32
    return %arg0, %c0_i32 : i32, i32
  }
}

</mosaic_0001>

<llo_original>
// kernel: tpu_custom_call.1
$region0: #{tpu_custom_call.1}
  #allocation0 [shape = 'u32[]', space=smem, size = 0x4, offset = 0x4, fixed_abs, tag = 'smem constant byte address 0x4 - core index']
  #allocation1 [shape = 'u32[144,128]{1,0:T(1,128)}', space=vmem, size = 0x12000, scoped, tag = 'internal scratch']
  %s0 = inlined_call_operand.vmem [shape: s32[384,3], index: 0, kind: input, shape index: {}]
  %s1 = inlined_call_operand.vmem [shape: bf16[384,128], index: 1, kind: input, shape index: {}]
  %s2 = inlined_call_operand.vmem [shape: f32[1,128], index: 2, kind: input, shape index: {}]
  %s3 = inlined_call_operand.hbm [shape: f32[16,128], index: 3, kind: output, shape index: {}]
  %s4 = sld [smem:[#allocation0]]
  $region22: #{tpu_custom_call.1} parent=0
    _
  %s6 = ssub.s32 1, %s4
  %s7 = scalar_select 0, %s6, %s4
  $region1: #{tpu_custom_call.1} parent=0
    #allocation2 [shape = 'u8[8192]{0}', space=vmem, size = 0x2000, scoped, tag = 'output window, operand 0, single buffered']
    #allocation3 [shape = 's32[1]{0}', space=sflag, size = 0x4, scoped, tag = 'scoped memory for tpu_custom_call.1']
    %8 = vsyncpa [#allocation3], 0
    // Predicated region
    $region2: #{tpu_custom_call.1} parent=1 // pred_check
      _
    $region3: #{tpu_custom_call.1} parent=1 // pred_check_branch
      %10 = sbr.rel (0) target = $region5
    $region4: #{tpu_custom_call.1} parent=1 // pred_region
      _
    $region5: #{tpu_custom_call.1} parent=1 // pred_fallthru
      _
    // Predicated region
    $region6: #{tpu_custom_call.1} parent=1 // pred_check
      _
    $region7: #{tpu_custom_call.1} parent=1 // pred_check_branch
      %12 = sbr.rel (0) target = $region9
    $region8: #{tpu_custom_call.1} parent=1 // pred_region
      _
    $region9: #{tpu_custom_call.1} parent=1 // pred_fallthru
      _
    // Predicated region
    $region10: #{tpu_custom_call.1} parent=1 // pred_check
      _
    $region11: #{tpu_custom_call.1} parent=1 // pred_check_branch
      %14 = sbr.rel (0) target = $region13
    $region12: #{tpu_custom_call.1} parent=1 // pred_region
      _
    $region13: #{tpu_custom_call.1} parent=1 // pred_fallthru
      _
    %v16 = vld [vmem:[%s0] sm:$0xff]
    %v17 = vld [vmem:[%s0 + $0x8] sm:$0xff]
    %v18 = vld [vmem:[%s0 + $0x10] sm:$0xff]
    %v19 = vld [vmem:[%s0 + $0x18] sm:$0xff]
    %v20 = vld [vmem:[%s0 + $0x20] sm:$0xff]
    %v21 = vld [vmem:[%s0 + $0x28] sm:$0xff]
    %v22 = vld [vmem:[%s0 + $0x30] sm:$0xff]
    %v23 = vld [vmem:[%s0 + $0x38] sm:$0xff]
    %v24 = vld [vmem:[%s0 + $0x40] sm:$0xff]
    %v25 = vld [vmem:[%s0 + $0x48] sm:$0xff]
    %v26 = vld [vmem:[%s0 + $0x50] sm:$0xff]
    %v27 = vld [vmem:[%s0 + $0x58] sm:$0xff]
    %v28 = vld [vmem:[%s0 + $0x60] sm:$0xff]
    %v29 = vld [vmem:[%s0 + $0x68] sm:$0xff]
    %v30 = vld [vmem:[%s0 + $0x70] sm:$0xff]
    %v31 = vld [vmem:[%s0 + $0x78] sm:$0xff]
    %v32 = vld [vmem:[%s0 + $0x80] sm:$0xff]
    %v33 = vld [vmem:[%s0 + $0x88] sm:$0xff]
    %v34 = vld [vmem:[%s0 + $0x90] sm:$0xff]
    %v35 = vld [vmem:[%s0 + $0x98] sm:$0xff]
    %v36 = vld [vmem:[%s0 + $0xa0] sm:$0xff]
    %v37 = vld [vmem:[%s0 + $0xa8] sm:$0xff]
    %v38 = vld [vmem:[%s0 + $0xb0] sm:$0xff]
    %v39 = vld [vmem:[%s0 + $0xb8] sm:$0xff]
    %v40 = vld [vmem:[%s0 + $0xc0] sm:$0xff]
    %v41 = vld [vmem:[%s0 + $0xc8] sm:$0xff]
    %v42 = vld [vmem:[%s0 + $0xd0] sm:$0xff]
    %v43 = vld [vmem:[%s0 + $0xd8] sm:$0xff]
    %v44 = vld [vmem:[%s0 + $0xe0] sm:$0xff]
    %v45 = vld [vmem:[%s0 + $0xe8] sm:$0xff]
    %v46 = vld [vmem:[%s0 + $0xf0] sm:$0xff]
    %v47 = vld [vmem:[%s0 + $0xf8] sm:$0xff]
    %v48 = vld [vmem:[%s0 + $0x100] sm:$0xff]
    %v49 = vld [vmem:[%s0 + $0x108] sm:$0xff]
    %v50 = vld [vmem:[%s0 + $0x110] sm:$0xff]
    %v51 = vld [vmem:[%s0 + $0x118] sm:$0xff]
    %v52 = vld [vmem:[%s0 + $0x120] sm:$0xff]
    %v53 = vld [vmem:[%s0 + $0x128] sm:$0xff]
    %v54 = vld [vmem:[%s0 + $0x130] sm:$0xff]
    %v55 = vld [vmem:[%s0 + $0x138] sm:$0xff]
    %v56 = vld [vmem:[%s0 + $0x140] sm:$0xff]
    %v57 = vld [vmem:[%s0 + $0x148] sm:$0xff]
    %v58 = vld [vmem:[%s0 + $0x150] sm:$0xff]
    %v59 = vld [vmem:[%s0 + $0x158] sm:$0xff]
    %v60 = vld [vmem:[%s0 + $0x160] sm:$0xff]
    %v61 = vld [vmem:[%s0 + $0x168] sm:$0xff]
    %v62 = vld [vmem:[%s0 + $0x170] sm:$0xff]
    %v63 = vld [vmem:[%s0 + $0x178] sm:$0xff]
    %v64 = vlaneseq
    %v65 = vand.u32 %v64, 127
    %66 = vset.pattern.permute.xlu0 0
    %67 = vperm.xlu0 %66, %v16
    %v68 = vpop.permute.xlu0 %67
    %69 = vset.pattern.permute.xlu0 0
    %70 = vperm.xlu0 %69, %v17
    %v71 = vpop.permute.xlu0 %70
    %72 = vset.pattern.permute.xlu0 0
    %73 = vperm.xlu0 %72, %v18
    %v74 = vpop.permute.xlu0 %73
    %75 = vset.pattern.permute.xlu0 0
    %76 = vperm.xlu0 %75, %v19
    %v77 = vpop.permute.xlu0 %76
    %78 = vset.pattern.permute.xlu0 0
    %79 = vperm.xlu0 %78, %v20
    %v80 = vpop.permute.xlu0 %79
    %81 = vset.pattern.permute.xlu0 0
    %82 = vperm.xlu0 %81, %v21
    %v83 = vpop.permute.xlu0 %82
    %84 = vset.pattern.permute.xlu0 0
    %85 = vperm.xlu0 %84, %v22
    %v86 = vpop.permute.xlu0 %85
    %87 = vset.pattern.permute.xlu0 0
    %88 = vperm.xlu0 %87, %v23
    %v89 = vpop.permute.xlu0 %88
    %90 = vset.pattern.permute.xlu0 0
    %91 = vperm.xlu0 %90, %v24
    %v92 = vpop.permute.xlu0 %91
    %93 = vset.pattern.permute.xlu0 0
    %94 = vperm.xlu0 %93, %v25
    %v95 = vpop.permute.xlu0 %94
    %96 = vset.pattern.permute.xlu0 0
    %97 = vperm.xlu0 %96, %v26
    %v98 = vpop.permute.xlu0 %97
    %99 = vset.pattern.permute.xlu0 0
    %100 = vperm.xlu0 %99, %v27
    %v101 = vpop.permute.xlu0 %100
    %102 = vset.pattern.permute.xlu0 0
    %103 = vperm.xlu0 %102, %v28
    %v104 = vpop.permute.xlu0 %103
    %105 = vset.pattern.permute.xlu0 0
    %106 = vperm.xlu0 %105, %v29
    %v107 = vpop.permute.xlu0 %106
    %108 = vset.pattern.permute.xlu0 0
    %109 = vperm.xlu0 %108, %v30
    %v110 = vpop.permute.xlu0 %109
    %111 = vset.pattern.permute.xlu0 0
    %112 = vperm.xlu0 %111, %v31
    %v113 = vpop.permute.xlu0 %112
    %114 = vset.pattern.permute.xlu0 0
    %115 = vperm.xlu0 %114, %v32
    %v116 = vpop.permute.xlu0 %115
    %117 = vset.pattern.permute.xlu0 0
    %118 = vperm.xlu0 %117, %v33
    %v119 = vpop.permute.xlu0 %118
    %120 = vset.pattern.permute.xlu0 0
    %121 = vperm.xlu0 %120, %v34
    %v122 = vpop.permute.xlu0 %121
    %123 = vset.pattern.permute.xlu0 0
    %124 = vperm.xlu0 %123, %v35
    %v125 = vpop.permute.xlu0 %124
    %126 = vset.pattern.permute.xlu0 0
    %127 = vperm.xlu0 %126, %v36
    %v128 = vpop.permute.xlu0 %127
    %129 = vset.pattern.permute.xlu0 0
    %130 = vperm.xlu0 %129, %v37
    %v131 = vpop.permute.xlu0 %130
    %132 = vset.pattern.permute.xlu0 0
    %133 = vperm.xlu0 %132, %v38
    %v134 = vpop.permute.xlu0 %133
    %135 = vset.pattern.permute.xlu0 0
    %136 = vperm.xlu0 %135, %v39
    %v137 = vpop.permute.xlu0 %136
    %138 = vset.pattern.permute.xlu0 0
    %139 = vperm.xlu0 %138, %v40
    %v140 = vpop.permute.xlu0 %139
    %141 = vset.pattern.permute.xlu0 0
    %142 = vperm.xlu0 %141, %v41
    %v143 = vpop.permute.xlu0 %142
    %144 = vset.pattern.permute.xlu0 0
    %145 = vperm.xlu0 %144, %v42
    %v146 = vpop.permute.xlu0 %145
    %147 = vset.pattern.permute.xlu0 0
    %148 = vperm.xlu0 %147, %v43
    %v149 = vpop.permute.xlu0 %148
    %150 = vset.pattern.permute.xlu0 0
    %151 = vperm.xlu0 %150, %v44
    %v152 = vpop.permute.xlu0 %151
    %153 = vset.pattern.permute.xlu0 0
    %154 = vperm.xlu0 %153, %v45
    %v155 = vpop.permute.xlu0 %154
    %156 = vset.pattern.permute.xlu0 0
    %157 = vperm.xlu0 %156, %v46
    %v158 = vpop.permute.xlu0 %157
    %159 = vset.pattern.permute.xlu0 0
    %160 = vperm.xlu0 %159, %v47
    %v161 = vpop.permute.xlu0 %160
    %162 = vset.pattern.permute.xlu0 0
    %163 = vperm.xlu0 %162, %v48
    %v164 = vpop.permute.xlu0 %163
    %165 = vset.pattern.permute.xlu0 0
    %166 = vperm.xlu0 %165, %v49
    %v167 = vpop.permute.xlu0 %166
    %168 = vset.pattern.permute.xlu0 0
    %169 = vperm.xlu0 %168, %v50
    %v170 = vpop.permute.xlu0 %169
    %171 = vset.pattern.permute.xlu0 0
    %172 = vperm.xlu0 %171, %v51
    %v173 = vpop.permute.xlu0 %172
    %174 = vset.pattern.permute.xlu0 0
    %175 = vperm.xlu0 %174, %v52
    %v176 = vpop.permute.xlu0 %175
    %177 = vset.pattern.permute.xlu0 0
    %178 = vperm.xlu0 %177, %v53
    %v179 = vpop.permute.xlu0 %178
    %180 = vset.pattern.permute.xlu0 0
    %181 = vperm.xlu0 %180, %v54
    %v182 = vpop.permute.xlu0 %181
    %183 = vset.pattern.permute.xlu0 0
    %184 = vperm.xlu0 %183, %v55
    %v185 = vpop.permute.xlu0 %184
    %186 = vset.pattern.permute.xlu0 0
    %187 = vperm.xlu0 %186, %v56
    %v188 = vpop.permute.xlu0 %187
    %189 = vset.pattern.permute.xlu0 0
    %190 = vperm.xlu0 %189, %v57
    %v191 = vpop.permute.xlu0 %190
    %192 = vset.pattern.permute.xlu0 0
    %193 = vperm.xlu0 %192, %v58
    %v194 = vpop.permute.xlu0 %193
    %195 = vset.pattern.permute.xlu0 0
    %196 = vperm.xlu0 %195, %v59
    %v197 = vpop.permute.xlu0 %196
    %198 = vset.pattern.permute.xlu0 0
    %199 = vperm.xlu0 %198, %v60
    %v200 = vpop.permute.xlu0 %199
    %201 = vset.pattern.permute.xlu0 0
    %202 = vperm.xlu0 %201, %v61
    %v203 = vpop.permute.xlu0 %202
    %204 = vset.pattern.permute.xlu0 0
    %205 = vperm.xlu0 %204, %v62
    %v206 = vpop.permute.xlu0 %205
    %207 = vset.pattern.permute.xlu0 0
    %208 = vperm.xlu0 %207, %v63
    %v209 = vpop.permute.xlu0 %208
    %vm210 = vcmp.eq.s32.totalorder %v65, %v68
    %vm211 = vcmp.eq.s32.totalorder %v65, %v71
    %vm212 = vcmp.eq.s32.totalorder %v65, %v74
    %vm213 = vcmp.eq.s32.totalorder %v65, %v77
    %vm214 = vcmp.eq.s32.totalorder %v65, %v80
    %vm215 = vcmp.eq.s32.totalorder %v65, %v83
    %vm216 = vcmp.eq.s32.totalorder %v65, %v86
    %vm217 = vcmp.eq.s32.totalorder %v65, %v89
    %vm218 = vcmp.eq.s32.totalorder %v65, %v92
    %vm219 = vcmp.eq.s32.totalorder %v65, %v95
    %vm220 = vcmp.eq.s32.totalorder %v65, %v98
    %vm221 = vcmp.eq.s32.totalorder %v65, %v101
    %vm222 = vcmp.eq.s32.totalorder %v65, %v104
    %vm223 = vcmp.eq.s32.totalorder %v65, %v107
    %vm224 = vcmp.eq.s32.totalorder %v65, %v110
    %vm225 = vcmp.eq.s32.totalorder %v65, %v113
    %vm226 = vcmp.eq.s32.totalorder %v65, %v116
    %vm227 = vcmp.eq.s32.totalorder %v65, %v119
    %vm228 = vcmp.eq.s32.totalorder %v65, %v122
    %vm229 = vcmp.eq.s32.totalorder %v65, %v125
    %vm230 = vcmp.eq.s32.totalorder %v65, %v128
    %vm231 = vcmp.eq.s32.totalorder %v65, %v131
    %vm232 = vcmp.eq.s32.totalorder %v65, %v134
    %vm233 = vcmp.eq.s32.totalorder %v65, %v137
    %vm234 = vcmp.eq.s32.totalorder %v65, %v140
    %vm235 = vcmp.eq.s32.totalorder %v65, %v143
    %vm236 = vcmp.eq.s32.totalorder %v65, %v146
    %vm237 = vcmp.eq.s32.totalorder %v65, %v149
    %vm238 = vcmp.eq.s32.totalorder %v65, %v152
    %vm239 = vcmp.eq.s32.totalorder %v65, %v155
    %vm240 = vcmp.eq.s32.totalorder %v65, %v158
    %vm241 = vcmp.eq.s32.totalorder %v65, %v161
    %vm242 = vcmp.eq.s32.totalorder %v65, %v164
    %vm243 = vcmp.eq.s32.totalorder %v65, %v167
    %vm244 = vcmp.eq.s32.totalorder %v65, %v170
    %vm245 = vcmp.eq.s32.totalorder %v65, %v173
    %vm246 = vcmp.eq.s32.totalorder %v65, %v176
    %vm247 = vcmp.eq.s32.totalorder %v65, %v179
    %vm248 = vcmp.eq.s32.totalorder %v65, %v182
    %vm249 = vcmp.eq.s32.totalorder %v65, %v185
    %vm250 = vcmp.eq.s32.totalorder %v65, %v188
    %vm251 = vcmp.eq.s32.totalorder %v65, %v191
    %vm252 = vcmp.eq.s32.totalorder %v65, %v194
    %vm253 = vcmp.eq.s32.totalorder %v65, %v197
    %vm254 = vcmp.eq.s32.totalorder %v65, %v200
    %vm255 = vcmp.eq.s32.totalorder %v65, %v203
    %vm256 = vcmp.eq.s32.totalorder %v65, %v206
    %vm257 = vcmp.eq.s32.totalorder %v65, %v209
    %v258 = vsel %vm210, 1, 0
    %v259 = vsel %vm211, 1, 0
    %v260 = vsel %vm212, 1, 0
    %v261 = vsel %vm213, 1, 0
    %v262 = vsel %vm214, 1, 0
    %v263 = vsel %vm215, 1, 0
    %v264 = vsel %vm216, 1, 0
    %v265 = vsel %vm217, 1, 0
    %v266 = vsel %vm218, 1, 0
    %v267 = vsel %vm219, 1, 0
    %v268 = vsel %vm220, 1, 0
    %v269 = vsel %vm221, 1, 0
    %v270 = vsel %vm222, 1, 0
    %v271 = vsel %vm223, 1, 0
    %v272 = vsel %vm224, 1, 0
    %v273 = vsel %vm225, 1, 0
    %v274 = vsel %vm226, 1, 0
    %v275 = vsel %vm227, 1, 0
    %v276 = vsel %vm228, 1, 0
    %v277 = vsel %vm229, 1, 0
    %v278 = vsel %vm230, 1, 0
    %v279 = vsel %vm231, 1, 0
    %v280 = vsel %vm232, 1, 0
    %v281 = vsel %vm233, 1, 0
    %v282 = vsel %vm234, 1, 0
    %v283 = vsel %vm235, 1, 0
    %v284 = vsel %vm236, 1, 0
    %v285 = vsel %vm237, 1, 0
    %v286 = vsel %vm238, 1, 0
    %v287 = vsel %vm239, 1, 0
    %v288 = vsel %vm240, 1, 0
    %v289 = vsel %vm241, 1, 0
    %v290 = vsel %vm242, 1, 0
    %v291 = vsel %vm243, 1, 0
    %v292 = vsel %vm244, 1, 0
    %v293 = vsel %vm245, 1, 0
    %v294 = vsel %vm246, 1, 0
    %v295 = vsel %vm247, 1, 0
    %v296 = vsel %vm248, 1, 0
    %v297 = vsel %vm249, 1, 0
    %v298 = vsel %vm250, 1, 0
    %v299 = vsel %vm251, 1, 0
    %v300 = vsel %vm252, 1, 0
    %v301 = vsel %vm253, 1, 0
    %v302 = vsel %vm254, 1, 0
    %v303 = vsel %vm255, 1, 0
    %v304 = vsel %vm256, 1, 0
    %v305 = vsel %vm257, 1, 0
    %v306 = vcvt.s32.f32 %v258
    %v307 = vcvt.s32.f32 %v259
    %v308 = vcvt.s32.f32 %v260
    %v309 = vcvt.s32.f32 %v261
    %v310 = vcvt.s32.f32 %v262
    %v311 = vcvt.s32.f32 %v263
    %v312 = vcvt.s32.f32 %v264
    %v313 = vcvt.s32.f32 %v265
    %v314 = vcvt.s32.f32 %v266
    %v315 = vcvt.s32.f32 %v267
    %v316 = vcvt.s32.f32 %v268
    %v317 = vcvt.s32.f32 %v269
    %v318 = vcvt.s32.f32 %v270
    %v319 = vcvt.s32.f32 %v271
    %v320 = vcvt.s32.f32 %v272
    %v321 = vcvt.s32.f32 %v273
    %v322 = vcvt.s32.f32 %v274
    %v323 = vcvt.s32.f32 %v275
    %v324 = vcvt.s32.f32 %v276
    %v325 = vcvt.s32.f32 %v277
    %v326 = vcvt.s32.f32 %v278
    %v327 = vcvt.s32.f32 %v279
    %v328 = vcvt.s32.f32 %v280
    %v329 = vcvt.s32.f32 %v281
    %v330 = vcvt.s32.f32 %v282
    %v331 = vcvt.s32.f32 %v283
    %v332 = vcvt.s32.f32 %v284
    %v333 = vcvt.s32.f32 %v285
    %v334 = vcvt.s32.f32 %v286
    %v335 = vcvt.s32.f32 %v287
    %v336 = vcvt.s32.f32 %v288
    %v337 = vcvt.s32.f32 %v289
    %v338 = vcvt.s32.f32 %v290
    %v339 = vcvt.s32.f32 %v291
    %v340 = vcvt.s32.f32 %v292
    %v341 = vcvt.s32.f32 %v293
    %v342 = vcvt.s32.f32 %v294
    %v343 = vcvt.s32.f32 %v295
    %v344 = vcvt.s32.f32 %v296
    %v345 = vcvt.s32.f32 %v297
    %v346 = vcvt.s32.f32 %v298
    %v347 = vcvt.s32.f32 %v299
    %v348 = vcvt.s32.f32 %v300
    %v349 = vcvt.s32.f32 %v301
    %v350 = vcvt.s32.f32 %v302
    %v351 = vcvt.s32.f32 %v303
    %v352 = vcvt.s32.f32 %v304
    %v353 = vcvt.s32.f32 %v305
    %v354 = vpack.c.bf16 %v307, %v306
    %v355 = vpack.c.bf16 %v309, %v308
    %v356 = vpack.c.bf16 %v311, %v310
    %v357 = vpack.c.bf16 %v313, %v312
    %v358 = vpack.c.bf16 %v315, %v314
    %v359 = vpack.c.bf16 %v317, %v316
    %v360 = vpack.c.bf16 %v319, %v318
    %v361 = vpack.c.bf16 %v321, %v320
    %v362 = vpack.c.bf16 %v323, %v322
    %v363 = vpack.c.bf16 %v325, %v324
    %v364 = vpack.c.bf16 %v327, %v326
    %v365 = vpack.c.bf16 %v329, %v328
    %v366 = vpack.c.bf16 %v331, %v330
    %v367 = vpack.c.bf16 %v333, %v332
    %v368 = vpack.c.bf16 %v335, %v334
    %v369 = vpack.c.bf16 %v337, %v336
    %v370 = vpack.c.bf16 %v339, %v338
    %v371 = vpack.c.bf16 %v341, %v340
    %v372 = vpack.c.bf16 %v343, %v342
    %v373 = vpack.c.bf16 %v345, %v344
    %v374 = vpack.c.bf16 %v347, %v346
    %v375 = vpack.c.bf16 %v349, %v348
    %v376 = vpack.c.bf16 %v351, %v350
    %v377 = vpack.c.bf16 %v353, %v352
    %378 = vset.pattern.permute.xlu0 1
    %379 = vperm.xlu0 %378, %v16
    %v380 = vpop.permute.xlu0 %379
    %381 = vset.pattern.permute.xlu0 1
    %382 = vperm.xlu0 %381, %v17
    %v383 = vpop.permute.xlu0 %382
    %384 = vset.pattern.permute.xlu0 1
    %385 = vperm.xlu0 %384, %v18
    %v386 = vpop.permute.xlu0 %385
    %387 = vset.pattern.permute.xlu0 1
    %388 = vperm.xlu0 %387, %v19
    %v389 = vpop.permute.xlu0 %388
    %390 = vset.pattern.permute.xlu0 1
    %391 = vperm.xlu0 %390, %v20
    %v392 = vpop.permute.xlu0 %391
    %393 = vset.pattern.permute.xlu0 1
    %394 = vperm.xlu0 %393, %v21
    %v395 = vpop.permute.xlu0 %394
    %396 = vset.pattern.permute.xlu0 1
    %397 = vperm.xlu0 %396, %v22
    %v398 = vpop.permute.xlu0 %397
    %399 = vset.pattern.permute.xlu0 1
    %400 = vperm.xlu0 %399, %v23
    %v401 = vpop.permute.xlu0 %400
    %402 = vset.pattern.permute.xlu0 1
    %403 = vperm.xlu0 %402, %v24
    %v404 = vpop.permute.xlu0 %403
    %405 = vset.pattern.permute.xlu0 1
    %406 = vperm.xlu0 %405, %v25
    %v407 = vpop.permute.xlu0 %406
    %408 = vset.pattern.permute.xlu0 1
    %409 = vperm.xlu0 %408, %v26
    %v410 = vpop.permute.xlu0 %409
    %411 = vset.pattern.permute.xlu0 1
    %412 = vperm.xlu0 %411, %v27
    %v413 = vpop.permute.xlu0 %412
    %414 = vset.pattern.permute.xlu0 1
    %415 = vperm.xlu0 %414, %v28
    %v416 = vpop.permute.xlu0 %415
    %417 = vset.pattern.permute.xlu0 1
    %418 = vperm.xlu0 %417, %v29
    %v419 = vpop.permute.xlu0 %418
    %420 = vset.pattern.permute.xlu0 1
    %421 = vperm.xlu0 %420, %v30
    %v422 = vpop.permute.xlu0 %421
    %423 = vset.pattern.permute.xlu0 1
    %424 = vperm.xlu0 %423, %v31
    %v425 = vpop.permute.xlu0 %424
    %426 = vset.pattern.permute.xlu0 1
    %427 = vperm.xlu0 %426, %v32
    %v428 = vpop.permute.xlu0 %427
    %429 = vset.pattern.permute.xlu0 1
    %430 = vperm.xlu0 %429, %v33
    %v431 = vpop.permute.xlu0 %430
    %432 = vset.pattern.permute.xlu0 1
    %433 = vperm.xlu0 %432, %v34
    %v434 = vpop.permute.xlu0 %433
    %435 = vset.pattern.permute.xlu0 1
    %436 = vperm.xlu0 %435, %v35
    %v437 = vpop.permute.xlu0 %436
    %438 = vset.pattern.permute.xlu0 1
    %439 = vperm.xlu0 %438, %v36
    %v440 = vpop.permute.xlu0 %439
    %441 = vset.pattern.permute.xlu0 1
    %442 = vperm.xlu0 %441, %v37
    %v443 = vpop.permute.xlu0 %442
    %444 = vset.pattern.permute.xlu0 1
    %445 = vperm.xlu0 %444, %v38
    %v446 = vpop.permute.xlu0 %445
    %447 = vset.pattern.permute.xlu0 1
    %448 = vperm.xlu0 %447, %v39
    %v449 = vpop.permute.xlu0 %448
    %450 = vset.pattern.permute.xlu0 1
    %451 = vperm.xlu0 %450, %v40
    %v452 = vpop.permute.xlu0 %451
    %453 = vset.pattern.permute.xlu0 1
    %454 = vperm.xlu0 %453, %v41
    %v455 = vpop.permute.xlu0 %454
    %456 = vset.pattern.permute.xlu0 1
    %457 = vperm.xlu0 %456, %v42
    %v458 = vpop.permute.xlu0 %457
    %459 = vset.pattern.permute.xlu0 1
    %460 = vperm.xlu0 %459, %v43
    %v461 = vpop.permute.xlu0 %460
    %462 = vset.pattern.permute.xlu0 1
    %463 = vperm.xlu0 %462, %v44
    %v464 = vpop.permute.xlu0 %463
    %465 = vset.pattern.permute.xlu0 1
    %466 = vperm.xlu0 %465, %v45
    %v467 = vpop.permute.xlu0 %466
    %468 = vset.pattern.permute.xlu0 1
    %469 = vperm.xlu0 %468, %v46
    %v470 = vpop.permute.xlu0 %469
    %471 = vset.pattern.permute.xlu0 1
    %472 = vperm.xlu0 %471, %v47
    %v473 = vpop.permute.xlu0 %472
    %474 = vset.pattern.permute.xlu0 1
    %475 = vperm.xlu0 %474, %v48
    %v476 = vpop.permute.xlu0 %475
    %477 = vset.pattern.permute.xlu0 1
    %478 = vperm.xlu0 %477, %v49
    %v479 = vpop.permute.xlu0 %478
    %480 = vset.pattern.permute.xlu0 1
    %481 = vperm.xlu0 %480, %v50
    %v482 = vpop.permute.xlu0 %481
    %483 = vset.pattern.permute.xlu0 1
    %484 = vperm.xlu0 %483, %v51
    %v485 = vpop.permute.xlu0 %484
    %486 = vset.pattern.permute.xlu0 1
    %487 = vperm.xlu0 %486, %v52
    %v488 = vpop.permute.xlu0 %487
    %489 = vset.pattern.permute.xlu0 1
    %490 = vperm.xlu0 %489, %v53
    %v491 = vpop.permute.xlu0 %490
    %492 = vset.pattern.permute.xlu0 1
    %493 = vperm.xlu0 %492, %v54
    %v494 = vpop.permute.xlu0 %493
    %495 = vset.pattern.permute.xlu0 1
    %496 = vperm.xlu0 %495, %v55
    %v497 = vpop.permute.xlu0 %496
    %498 = vset.pattern.permute.xlu0 1
    %499 = vperm.xlu0 %498, %v56
    %v500 = vpop.permute.xlu0 %499
    %501 = vset.pattern.permute.xlu0 1
    %502 = vperm.xlu0 %501, %v57
    %v503 = vpop.permute.xlu0 %502
    %504 = vset.pattern.permute.xlu0 1
    %505 = vperm.xlu0 %504, %v58
    %v506 = vpop.permute.xlu0 %505
    %507 = vset.pattern.permute.xlu0 1
    %508 = vperm.xlu0 %507, %v59
    %v509 = vpop.permute.xlu0 %508
    %510 = vset.pattern.permute.xlu0 1
    %511 = vperm.xlu0 %510, %v60
    %v512 = vpop.permute.xlu0 %511
    %513 = vset.pattern.permute.xlu0 1
    %514 = vperm.xlu0 %513, %v61
    %v515 = vpop.permute.xlu0 %514
    %516 = vset.pattern.permute.xlu0 1
    %517 = vperm.xlu0 %516, %v62
    %v518 = vpop.permute.xlu0 %517
    %519 = vset.pattern.permute.xlu0 1
    %520 = vperm.xlu0 %519, %v63
    %v521 = vpop.permute.xlu0 %520
    %vm522 = vcmp.eq.s32.totalorder %v65, %v380
    %vm523 = vcmp.eq.s32.totalorder %v65, %v383
    %vm524 = vcmp.eq.s32.totalorder %v65, %v386
    %vm525 = vcmp.eq.s32.totalorder %v65, %v389
    %vm526 = vcmp.eq.s32.totalorder %v65, %v392
    %vm527 = vcmp.eq.s32.totalorder %v65, %v395
    %vm528 = vcmp.eq.s32.totalorder %v65, %v398
    %vm529 = vcmp.eq.s32.totalorder %v65, %v401
    %vm530 = vcmp.eq.s32.totalorder %v65, %v404
    %vm531 = vcmp.eq.s32.totalorder %v65, %v407
    %vm532 = vcmp.eq.s32.totalorder %v65, %v410
    %vm533 = vcmp.eq.s32.totalorder %v65, %v413
    %vm534 = vcmp.eq.s32.totalorder %v65, %v416
    %vm535 = vcmp.eq.s32.totalorder %v65, %v419
    %vm536 = vcmp.eq.s32.totalorder %v65, %v422
    %vm537 = vcmp.eq.s32.totalorder %v65, %v425
    %vm538 = vcmp.eq.s32.totalorder %v65, %v428
    %vm539 = vcmp.eq.s32.totalorder %v65, %v431
    %vm540 = vcmp.eq.s32.totalorder %v65, %v434
    %vm541 = vcmp.eq.s32.totalorder %v65, %v437
    %vm542 = vcmp.eq.s32.totalorder %v65, %v440
    %vm543 = vcmp.eq.s32.totalorder %v65, %v443
    %vm544 = vcmp.eq.s32.totalorder %v65, %v446
    %vm545 = vcmp.eq.s32.totalorder %v65, %v449
    %vm546 = vcmp.eq.s32.totalorder %v65, %v452
    %vm547 = vcmp.eq.s32.totalorder %v65, %v455
    %vm548 = vcmp.eq.s32.totalorder %v65, %v458
    %vm549 = vcmp.eq.s32.totalorder %v65, %v461
    %vm550 = vcmp.eq.s32.totalorder %v65, %v464
    %vm551 = vcmp.eq.s32.totalorder %v65, %v467
    %vm552 = vcmp.eq.s32.totalorder %v65, %v470
    %vm553 = vcmp.eq.s32.totalorder %v65, %v473
    %vm554 = vcmp.eq.s32.totalorder %v65, %v476
    %vm555 = vcmp.eq.s32.totalorder %v65, %v479
    %vm556 = vcmp.eq.s32.totalorder %v65, %v482
    %vm557 = vcmp.eq.s32.totalorder %v65, %v485
    %vm558 = vcmp.eq.s32.totalorder %v65, %v488
    %vm559 = vcmp.eq.s32.totalorder %v65, %v491
    %vm560 = vcmp.eq.s32.totalorder %v65, %v494
    %vm561 = vcmp.eq.s32.totalorder %v65, %v497
    %vm562 = vcmp.eq.s32.totalorder %v65, %v500
    %vm563 = vcmp.eq.s32.totalorder %v65, %v503
    %vm564 = vcmp.eq.s32.totalorder %v65, %v506
    %vm565 = vcmp.eq.s32.totalorder %v65, %v509
    %vm566 = vcmp.eq.s32.totalorder %v65, %v512
    %vm567 = vcmp.eq.s32.totalorder %v65, %v515
    %vm568 = vcmp.eq.s32.totalorder %v65, %v518
    %vm569 = vcmp.eq.s32.totalorder %v65, %v521
    %v570 = vsel %vm522, 1, 0
    %v571 = vsel %vm523, 1, 0
    %v572 = vsel %vm524, 1, 0
    %v573 = vsel %vm525, 1, 0
    %v574 = vsel %vm526, 1, 0
    %v575 = vsel %vm527, 1, 0
    %v576 = vsel %vm528, 1, 0
    %v577 = vsel %vm529, 1, 0
    %v578 = vsel %vm530, 1, 0
    %v579 = vsel %vm531, 1, 0
    %v580 = vsel %vm532, 1, 0
    %v581 = vsel %vm533, 1, 0
    %v582 = vsel %vm534, 1, 0
    %v583 = vsel %vm535, 1, 0
    %v584 = vsel %vm536, 1, 0
    %v585 = vsel %vm537, 1, 0
    %v586 = vsel %vm538, 1, 0
    %v587 = vsel %vm539, 1, 0
    %v588 = vsel %vm540, 1, 0
    %v589 = vsel %vm541, 1, 0
    %v590 = vsel %vm542, 1, 0
    %v591 = vsel %vm543, 1, 0
    %v592 = vsel %vm544, 1, 0
    %v593 = vsel %vm545, 1, 0
    %v594 = vsel %vm546, 1, 0
    %v595 = vsel %vm547, 1, 0
    %v596 = vsel %vm548, 1, 0
    %v597 = vsel %vm549, 1, 0
    %v598 = vsel %vm550, 1, 0
    %v599 = vsel %vm551, 1, 0
    %v600 = vsel %vm552, 1, 0
    %v601 = vsel %vm553, 1, 0
    %v602 = vsel %vm554, 1, 0
    %v603 = vsel %vm555, 1, 0
    %v604 = vsel %vm556, 1, 0
    %v605 = vsel %vm557, 1, 0
    %v606 = vsel %vm558, 1, 0
    %v607 = vsel %vm559, 1, 0
    %v608 = vsel %vm560, 1, 0
    %v609 = vsel %vm561, 1, 0
    %v610 = vsel %vm562, 1, 0
    %v611 = vsel %vm563, 1, 0
    %v612 = vsel %vm564, 1, 0
    %v613 = vsel %vm565, 1, 0
    %v614 = vsel %vm566, 1, 0
    %v615 = vsel %vm567, 1, 0
    %v616 = vsel %vm568, 1, 0
    %v617 = vsel %vm569, 1, 0
    %v618 = vcvt.s32.f32 %v570
    %v619 = vcvt.s32.f32 %v571
    %v620 = vcvt.s32.f32 %v572
    %v621 = vcvt.s32.f32 %v573
    %v622 = vcvt.s32.f32 %v574
    %v623 = vcvt.s32.f32 %v575
    %v624 = vcvt.s32.f32 %v576
    %v625 = vcvt.s32.f32 %v577
    %v626 = vcvt.s32.f32 %v578
    %v627 = vcvt.s32.f32 %v579
    %v628 = vcvt.s32.f32 %v580
    %v629 = vcvt.s32.f32 %v581
    %v630 = vcvt.s32.f32 %v582
    %v631 = vcvt.s32.f32 %v583
    %v632 = vcvt.s32.f32 %v584
    %v633 = vcvt.s32.f32 %v585
    %v634 = vcvt.s32.f32 %v586
    %v635 = vcvt.s32.f32 %v587
    %v636 = vcvt.s32.f32 %v588
    %v637 = vcvt.s32.f32 %v589
    %v638 = vcvt.s32.f32 %v590
    %v639 = vcvt.s32.f32 %v591
    %v640 = vcvt.s32.f32 %v592
    %v641 = vcvt.s32.f32 %v593
    %v642 = vcvt.s32.f32 %v594
    %v643 = vcvt.s32.f32 %v595
    %v644 = vcvt.s32.f32 %v596
    %v645 = vcvt.s32.f32 %v597
    %v646 = vcvt.s32.f32 %v598
    %v647 = vcvt.s32.f32 %v599
    %v648 = vcvt.s32.f32 %v600
    %v649 = vcvt.s32.f32 %v601
    %v650 = vcvt.s32.f32 %v602
    %v651 = vcvt.s32.f32 %v603
    %v652 = vcvt.s32.f32 %v604
    %v653 = vcvt.s32.f32 %v605
    %v654 = vcvt.s32.f32 %v606
    %v655 = vcvt.s32.f32 %v607
    %v656 = vcvt.s32.f32 %v608
    %v657 = vcvt.s32.f32 %v609
    %v658 = vcvt.s32.f32 %v610
    %v659 = vcvt.s32.f32 %v611
    %v660 = vcvt.s32.f32 %v612
    %v661 = vcvt.s32.f32 %v613
    %v662 = vcvt.s32.f32 %v614
    %v663 = vcvt.s32.f32 %v615
    %v664 = vcvt.s32.f32 %v616
    %v665 = vcvt.s32.f32 %v617
    %v666 = vpack.c.bf16 %v619, %v618
    %v667 = vpack.c.bf16 %v621, %v620
    %v668 = vpack.c.bf16 %v623, %v622
    %v669 = vpack.c.bf16 %v625, %v624
    %v670 = vpack.c.bf16 %v627, %v626
    %v671 = vpack.c.bf16 %v629, %v628
    %v672 = vpack.c.bf16 %v631, %v630
    %v673 = vpack.c.bf16 %v633, %v632
    %v674 = vpack.c.bf16 %v635, %v634
    %v675 = vpack.c.bf16 %v637, %v636
    %v676 = vpack.c.bf16 %v639, %v638
    %v677 = vpack.c.bf16 %v641, %v640
    %v678 = vpack.c.bf16 %v643, %v642
    %v679 = vpack.c.bf16 %v645, %v644
    %v680 = vpack.c.bf16 %v647, %v646
    %v681 = vpack.c.bf16 %v649, %v648
    %v682 = vpack.c.bf16 %v651, %v650
    %v683 = vpack.c.bf16 %v653, %v652
    %v684 = vpack.c.bf16 %v655, %v654
    %v685 = vpack.c.bf16 %v657, %v656
    %v686 = vpack.c.bf16 %v659, %v658
    %v687 = vpack.c.bf16 %v661, %v660
    %v688 = vpack.c.bf16 %v663, %v662
    %v689 = vpack.c.bf16 %v665, %v664
    %690 = vset.pattern.permute.xlu0 2
    %691 = vperm.xlu0 %690, %v16
    %v692 = vpop.permute.xlu0 %691
    %693 = vset.pattern.permute.xlu0 2
    %694 = vperm.xlu0 %693, %v17
    %v695 = vpop.permute.xlu0 %694
    %696 = vset.pattern.permute.xlu0 2
    %697 = vperm.xlu0 %696, %v18
    %v698 = vpop.permute.xlu0 %697
    %699 = vset.pattern.permute.xlu0 2
    %700 = vperm.xlu0 %699, %v19
    %v701 = vpop.permute.xlu0 %700
    %702 = vset.pattern.permute.xlu0 2
    %703 = vperm.xlu0 %702, %v20
    %v704 = vpop.permute.xlu0 %703
    %705 = vset.pattern.permute.xlu0 2
    %706 = vperm.xlu0 %705, %v21
    %v707 = vpop.permute.xlu0 %706
    %708 = vset.pattern.permute.xlu0 2
    %709 = vperm.xlu0 %708, %v22
    %v710 = vpop.permute.xlu0 %709
    %711 = vset.pattern.permute.xlu0 2
    %712 = vperm.xlu0 %711, %v23
    %v713 = vpop.permute.xlu0 %712
    %714 = vset.pattern.permute.xlu0 2
    %715 = vperm.xlu0 %714, %v24
    %v716 = vpop.permute.xlu0 %715
    %717 = vset.pattern.permute.xlu0 2
    %718 = vperm.xlu0 %717, %v25
    %v719 = vpop.permute.xlu0 %718
    %720 = vset.pattern.permute.xlu0 2
    %721 = vperm.xlu0 %720, %v26
    %v722 = vpop.permute.xlu0 %721
    %723 = vset.pattern.permute.xlu0 2
    %724 = vperm.xlu0 %723, %v27
    %v725 = vpop.permute.xlu0 %724
    %726 = vset.pattern.permute.xlu0 2
    %727 = vperm.xlu0 %726, %v28
    %v728 = vpop.permute.xlu0 %727
    %729 = vset.pattern.permute.xlu0 2
    %730 = vperm.xlu0 %729, %v29
    %v731 = vpop.permute.xlu0 %730
    %732 = vset.pattern.permute.xlu0 2
    %733 = vperm.xlu0 %732, %v30
    %v734 = vpop.permute.xlu0 %733
    %735 = vset.pattern.permute.xlu0 2
    %736 = vperm.xlu0 %735, %v31
    %v737 = vpop.permute.xlu0 %736
    %738 = vset.pattern.permute.xlu0 2
    %739 = vperm.xlu0 %738, %v32
    %v740 = vpop.permute.xlu0 %739
    %741 = vset.pattern.permute.xlu0 2
    %742 = vperm.xlu0 %741, %v33
    %v743 = vpop.permute.xlu0 %742
    %744 = vset.pattern.permute.xlu0 2
    %745 = vperm.xlu0 %744, %v34
    %v746 = vpop.permute.xlu0 %745
    %747 = vset.pattern.permute.xlu0 2
    %748 = vperm.xlu0 %747, %v35
    %v749 = vpop.permute.xlu0 %748
    %750 = vset.pattern.permute.xlu0 2
    %751 = vperm.xlu0 %750, %v36
    %v752 = vpop.permute.xlu0 %751
    %753 = vset.pattern.permute.xlu0 2
    %754 = vperm.xlu0 %753, %v37
    %v755 = vpop.permute.xlu0 %754
    %756 = vset.pattern.permute.xlu0 2
    %757 = vperm.xlu0 %756, %v38
    %v758 = vpop.permute.xlu0 %757
    %759 = vset.pattern.permute.xlu0 2
    %760 = vperm.xlu0 %759, %v39
    %v761 = vpop.permute.xlu0 %760
    %762 = vset.pattern.permute.xlu0 2
    %763 = vperm.xlu0 %762, %v40
    %v764 = vpop.permute.xlu0 %763
    %765 = vset.pattern.permute.xlu0 2
    %766 = vperm.xlu0 %765, %v41
    %v767 = vpop.permute.xlu0 %766
    %768 = vset.pattern.permute.xlu0 2
    %769 = vperm.xlu0 %768, %v42
    %v770 = vpop.permute.xlu0 %769
    %771 = vset.pattern.permute.xlu0 2
    %772 = vperm.xlu0 %771, %v43
    %v773 = vpop.permute.xlu0 %772
    %774 = vset.pattern.permute.xlu0 2
    %775 = vperm.xlu0 %774, %v44
    %v776 = vpop.permute.xlu0 %775
    %777 = vset.pattern.permute.xlu0 2
    %778 = vperm.xlu0 %777, %v45
    %v779 = vpop.permute.xlu0 %778
    %780 = vset.pattern.permute.xlu0 2
    %781 = vperm.xlu0 %780, %v46
    %v782 = vpop.permute.xlu0 %781
    %783 = vset.pattern.permute.xlu0 2
    %784 = vperm.xlu0 %783, %v47
    %v785 = vpop.permute.xlu0 %784
    %786 = vset.pattern.permute.xlu0 2
    %787 = vperm.xlu0 %786, %v48
    %v788 = vpop.permute.xlu0 %787
    %789 = vset.pattern.permute.xlu0 2
    %790 = vperm.xlu0 %789, %v49
    %v791 = vpop.permute.xlu0 %790
    %792 = vset.pattern.permute.xlu0 2
    %793 = vperm.xlu0 %792, %v50
    %v794 = vpop.permute.xlu0 %793
    %795 = vset.pattern.permute.xlu0 2
    %796 = vperm.xlu0 %795, %v51
    %v797 = vpop.permute.xlu0 %796
    %798 = vset.pattern.permute.xlu0 2
    %799 = vperm.xlu0 %798, %v52
    %v800 = vpop.permute.xlu0 %799
    %801 = vset.pattern.permute.xlu0 2
    %802 = vperm.xlu0 %801, %v53
    %v803 = vpop.permute.xlu0 %802
    %804 = vset.pattern.permute.xlu0 2
    %805 = vperm.xlu0 %804, %v54
    %v806 = vpop.permute.xlu0 %805
    %807 = vset.pattern.permute.xlu0 2
    %808 = vperm.xlu0 %807, %v55
    %v809 = vpop.permute.xlu0 %808
    %810 = vset.pattern.permute.xlu0 2
    %811 = vperm.xlu0 %810, %v56
    %v812 = vpop.permute.xlu0 %811
    %813 = vset.pattern.permute.xlu0 2
    %814 = vperm.xlu0 %813, %v57
    %v815 = vpop.permute.xlu0 %814
    %816 = vset.pattern.permute.xlu0 2
    %817 = vperm.xlu0 %816, %v58
    %v818 = vpop.permute.xlu0 %817
    %819 = vset.pattern.permute.xlu0 2
    %820 = vperm.xlu0 %819, %v59
    %v821 = vpop.permute.xlu0 %820
    %822 = vset.pattern.permute.xlu0 2
    %823 = vperm.xlu0 %822, %v60
    %v824 = vpop.permute.xlu0 %823
    %825 = vset.pattern.permute.xlu0 2
    %826 = vperm.xlu0 %825, %v61
    %v827 = vpop.permute.xlu0 %826
    %828 = vset.pattern.permute.xlu0 2
    %829 = vperm.xlu0 %828, %v62
    %v830 = vpop.permute.xlu0 %829
    %831 = vset.pattern.permute.xlu0 2
    %832 = vperm.xlu0 %831, %v63
    %v833 = vpop.permute.xlu0 %832
    %vm834 = vcmp.eq.s32.totalorder %v65, %v692
    %vm835 = vcmp.eq.s32.totalorder %v65, %v695
    %vm836 = vcmp.eq.s32.totalorder %v65, %v698
    %vm837 = vcmp.eq.s32.totalorder %v65, %v701
    %vm838 = vcmp.eq.s32.totalorder %v65, %v704
    %vm839 = vcmp.eq.s32.totalorder %v65, %v707
    %vm840 = vcmp.eq.s32.totalorder %v65, %v710
    %vm841 = vcmp.eq.s32.totalorder %v65, %v713
    %vm842 = vcmp.eq.s32.totalorder %v65, %v716
    %vm843 = vcmp.eq.s32.totalorder %v65, %v719
    %vm844 = vcmp.eq.s32.totalorder %v65, %v722
    %vm845 = vcmp.eq.s32.totalorder %v65, %v725
    %vm846 = vcmp.eq.s32.totalorder %v65, %v728
    %vm847 = vcmp.eq.s32.totalorder %v65, %v731
    %vm848 = vcmp.eq.s32.totalorder %v65, %v734
    %vm849 = vcmp.eq.s32.totalorder %v65, %v737
    %vm850 = vcmp.eq.s32.totalorder %v65, %v740
    %vm851 = vcmp.eq.s32.totalorder %v65, %v743
    %vm852 = vcmp.eq.s32.totalorder %v65, %v746
    %vm853 = vcmp.eq.s32.totalorder %v65, %v749
    %vm854 = vcmp.eq.s32.totalorder %v65, %v752
    %vm855 = vcmp.eq.s32.totalorder %v65, %v755
    %vm856 = vcmp.eq.s32.totalorder %v65, %v758
    %vm857 = vcmp.eq.s32.totalorder %v65, %v761
    %vm858 = vcmp.eq.s32.totalorder %v65, %v764
    %vm859 = vcmp.eq.s32.totalorder %v65, %v767
    %vm860 = vcmp.eq.s32.totalorder %v65, %v770
    %vm861 = vcmp.eq.s32.totalorder %v65, %v773
    %vm862 = vcmp.eq.s32.totalorder %v65, %v776
    %vm863 = vcmp.eq.s32.totalorder %v65, %v779
    %vm864 = vcmp.eq.s32.totalorder %v65, %v782
    %vm865 = vcmp.eq.s32.totalorder %v65, %v785
    %vm866 = vcmp.eq.s32.totalorder %v65, %v788
    %vm867 = vcmp.eq.s32.totalorder %v65, %v791
    %vm868 = vcmp.eq.s32.totalorder %v65, %v794
    %vm869 = vcmp.eq.s32.totalorder %v65, %v797
    %vm870 = vcmp.eq.s32.totalorder %v65, %v800
    %vm871 = vcmp.eq.s32.totalorder %v65, %v803
    %vm872 = vcmp.eq.s32.totalorder %v65, %v806
    %vm873 = vcmp.eq.s32.totalorder %v65, %v809
    %vm874 = vcmp.eq.s32.totalorder %v65, %v812
    %vm875 = vcmp.eq.s32.totalorder %v65, %v815
    %vm876 = vcmp.eq.s32.totalorder %v65, %v818
    %vm877 = vcmp.eq.s32.totalorder %v65, %v821
    %vm878 = vcmp.eq.s32.totalorder %v65, %v824
    %vm879 = vcmp.eq.s32.totalorder %v65, %v827
    %vm880 = vcmp.eq.s32.totalorder %v65, %v830
    %vm881 = vcmp.eq.s32.totalorder %v65, %v833
    %v882 = vsel %vm834, 1, 0
    %v883 = vsel %vm835, 1, 0
    %v884 = vsel %vm836, 1, 0
    %v885 = vsel %vm837, 1, 0
    %v886 = vsel %vm838, 1, 0
    %v887 = vsel %vm839, 1, 0
    %v888 = vsel %vm840, 1, 0
    %v889 = vsel %vm841, 1, 0
    %v890 = vsel %vm842, 1, 0
    %v891 = vsel %vm843, 1, 0
    %v892 = vsel %vm844, 1, 0
    %v893 = vsel %vm845, 1, 0
    %v894 = vsel %vm846, 1, 0
    %v895 = vsel %vm847, 1, 0
    %v896 = vsel %vm848, 1, 0
    %v897 = vsel %vm849, 1, 0
    %v898 = vsel %vm850, 1, 0
    %v899 = vsel %vm851, 1, 0
    %v900 = vsel %vm852, 1, 0
    %v901 = vsel %vm853, 1, 0
    %v902 = vsel %vm854, 1, 0
    %v903 = vsel %vm855, 1, 0
    %v904 = vsel %vm856, 1, 0
    %v905 = vsel %vm857, 1, 0
    %v906 = vsel %vm858, 1, 0
    %v907 = vsel %vm859, 1, 0
    %v908 = vsel %vm860, 1, 0
    %v909 = vsel %vm861, 1, 0
    %v910 = vsel %vm862, 1, 0
    %v911 = vsel %vm863, 1, 0
    %v912 = vsel %vm864, 1, 0
    %v913 = vsel %vm865, 1, 0
    %v914 = vsel %vm866, 1, 0
    %v915 = vsel %vm867, 1, 0
    %v916 = vsel %vm868, 1, 0
    %v917 = vsel %vm869, 1, 0
    %v918 = vsel %vm870, 1, 0
    %v919 = vsel %vm871, 1, 0
    %v920 = vsel %vm872, 1, 0
    %v921 = vsel %vm873, 1, 0
    %v922 = vsel %vm874, 1, 0
    %v923 = vsel %vm875, 1, 0
    %v924 = vsel %vm876, 1, 0
    %v925 = vsel %vm877, 1, 0
    %v926 = vsel %vm878, 1, 0
    %v927 = vsel %vm879, 1, 0
    %v928 = vsel %vm880, 1, 0
    %v929 = vsel %vm881, 1, 0
    %v930 = vcvt.s32.f32 %v882
    %v931 = vcvt.s32.f32 %v883
    %v932 = vcvt.s32.f32 %v884
    %v933 = vcvt.s32.f32 %v885
    %v934 = vcvt.s32.f32 %v886
    %v935 = vcvt.s32.f32 %v887
    %v936 = vcvt.s32.f32 %v888
    %v937 = vcvt.s32.f32 %v889
    %v938 = vcvt.s32.f32 %v890
    %v939 = vcvt.s32.f32 %v891
    %v940 = vcvt.s32.f32 %v892
    %v941 = vcvt.s32.f32 %v893
    %v942 = vcvt.s32.f32 %v894
    %v943 = vcvt.s32.f32 %v895
    %v944 = vcvt.s32.f32 %v896
    %v945 = vcvt.s32.f32 %v897
    %v946 = vcvt.s32.f32 %v898
    %v947 = vcvt.s32.f32 %v899
    %v948 = vcvt.s32.f32 %v900
    %v949 = vcvt.s32.f32 %v901
    %v950 = vcvt.s32.f32 %v902
    %v951 = vcvt.s32.f32 %v903
    %v952 = vcvt.s32.f32 %v904
    %v953 = vcvt.s32.f32 %v905
    %v954 = vcvt.s32.f32 %v906
    %v955 = vcvt.s32.f32 %v907
    %v956 = vcvt.s32.f32 %v908
    %v957 = vcvt.s32.f32 %v909
    %v958 = vcvt.s32.f32 %v910
    %v959 = vcvt.s32.f32 %v911
    %v960 = vcvt.s32.f32 %v912
    %v961 = vcvt.s32.f32 %v913
    %v962 = vcvt.s32.f32 %v914
    %v963 = vcvt.s32.f32 %v915
    %v964 = vcvt.s32.f32 %v916
    %v965 = vcvt.s32.f32 %v917
    %v966 = vcvt.s32.f32 %v918
    %v967 = vcvt.s32.f32 %v919
    %v968 = vcvt.s32.f32 %v920
    %v969 = vcvt.s32.f32 %v921
    %v970 = vcvt.s32.f32 %v922
    %v971 = vcvt.s32.f32 %v923
    %v972 = vcvt.s32.f32 %v924
    %v973 = vcvt.s32.f32 %v925
    %v974 = vcvt.s32.f32 %v926
    %v975 = vcvt.s32.f32 %v927
    %v976 = vcvt.s32.f32 %v928
    %v977 = vcvt.s32.f32 %v929
    %v978 = vpack.c.bf16 %v931, %v930
    %v979 = vpack.c.bf16 %v933, %v932
    %v980 = vpack.c.bf16 %v935, %v934
    %v981 = vpack.c.bf16 %v937, %v936
    %v982 = vpack.c.bf16 %v939, %v938
    %v983 = vpack.c.bf16 %v941, %v940
    %v984 = vpack.c.bf16 %v943, %v942
    %v985 = vpack.c.bf16 %v945, %v944
    %v986 = vpack.c.bf16 %v947, %v946
    %v987 = vpack.c.bf16 %v949, %v948
    %v988 = vpack.c.bf16 %v951, %v950
    %v989 = vpack.c.bf16 %v953, %v952
    %v990 = vpack.c.bf16 %v955, %v954
    %v991 = vpack.c.bf16 %v957, %v956
    %v992 = vpack.c.bf16 %v959, %v958
    %v993 = vpack.c.bf16 %v961, %v960
    %v994 = vpack.c.bf16 %v963, %v962
    %v995 = vpack.c.bf16 %v965, %v964
    %v996 = vpack.c.bf16 %v967, %v966
    %v997 = vpack.c.bf16 %v969, %v968
    %v998 = vpack.c.bf16 %v971, %v970
    %v999 = vpack.c.bf16 %v973, %v972
    %v1000 = vpack.c.bf16 %v975, %v974
    %v1001 = vpack.c.bf16 %v977, %v976
    %v1002 = vld [vmem:[%s1] sm:$0xf]
    %v1003 = vld [vmem:[%s1 + $0x4] sm:$0xf]
    %v1004 = vld [vmem:[%s1 + $0x8] sm:$0xf]
    %v1005 = vld [vmem:[%s1 + $0xc] sm:$0xf]
    %v1006 = vld [vmem:[%s1 + $0x10] sm:$0xf]
    %v1007 = vld [vmem:[%s1 + $0x14] sm:$0xf]
    %v1008 = vld [vmem:[%s1 + $0x18] sm:$0xf]
    %v1009 = vld [vmem:[%s1 + $0x1c] sm:$0xf]
    %v1010 = vld [vmem:[%s1 + $0x20] sm:$0xf]
    %v1011 = vld [vmem:[%s1 + $0x24] sm:$0xf]
    %v1012 = vld [vmem:[%s1 + $0x28] sm:$0xf]
    %v1013 = vld [vmem:[%s1 + $0x2c] sm:$0xf]
    %v1014 = vld [vmem:[%s1 + $0x30] sm:$0xf]
    %v1015 = vld [vmem:[%s1 + $0x34] sm:$0xf]
    %v1016 = vld [vmem:[%s1 + $0x38] sm:$0xf]
    %v1017 = vld [vmem:[%s1 + $0x3c] sm:$0xf]
    %v1018 = vld [vmem:[%s1 + $0x40] sm:$0xf]
    %v1019 = vld [vmem:[%s1 + $0x44] sm:$0xf]
    %v1020 = vld [vmem:[%s1 + $0x48] sm:$0xf]
    %v1021 = vld [vmem:[%s1 + $0x4c] sm:$0xf]
    %v1022 = vld [vmem:[%s1 + $0x50] sm:$0xf]
    %v1023 = vld [vmem:[%s1 + $0x54] sm:$0xf]
    %v1024 = vld [vmem:[%s1 + $0x58] sm:$0xf]
    %v1025 = vld [vmem:[%s1 + $0x5c] sm:$0xf]
    %v1026 = vld [vmem:[%s1 + $0x60] sm:$0xf]
    %v1027 = vld [vmem:[%s1 + $0x64] sm:$0xf]
    %v1028 = vld [vmem:[%s1 + $0x68] sm:$0xf]
    %v1029 = vld [vmem:[%s1 + $0x6c] sm:$0xf]
    %v1030 = vld [vmem:[%s1 + $0x70] sm:$0xf]
    %v1031 = vld [vmem:[%s1 + $0x74] sm:$0xf]
    %v1032 = vld [vmem:[%s1 + $0x78] sm:$0xf]
    %v1033 = vld [vmem:[%s1 + $0x7c] sm:$0xf]
    %v1034 = vld [vmem:[%s1 + $0x80] sm:$0xf]
    %v1035 = vld [vmem:[%s1 + $0x84] sm:$0xf]
    %v1036 = vld [vmem:[%s1 + $0x88] sm:$0xf]
    %v1037 = vld [vmem:[%s1 + $0x8c] sm:$0xf]
    %v1038 = vld [vmem:[%s1 + $0x90] sm:$0xf]
    %v1039 = vld [vmem:[%s1 + $0x94] sm:$0xf]
    %v1040 = vld [vmem:[%s1 + $0x98] sm:$0xf]
    %v1041 = vld [vmem:[%s1 + $0x9c] sm:$0xf]
    %v1042 = vld [vmem:[%s1 + $0xa0] sm:$0xf]
    %v1043 = vld [vmem:[%s1 + $0xa4] sm:$0xf]
    %v1044 = vld [vmem:[%s1 + $0xa8] sm:$0xf]
    %v1045 = vld [vmem:[%s1 + $0xac] sm:$0xf]
    %v1046 = vld [vmem:[%s1 + $0xb0] sm:$0xf]
    %v1047 = vld [vmem:[%s1 + $0xb4] sm:$0xf]
    %v1048 = vld [vmem:[%s1 + $0xb8] sm:$0xf]
    %v1049 = vld [vmem:[%s1 + $0xbc] sm:$0xf]
    %v1098 = vunpack.c.l.b16 %v1002
    %v1099 = vunpack.c.l.b16 %v1003
    %v1100 = vunpack.c.l.b16 %v1004
    %v1101 = vunpack.c.l.b16 %v1005
    %v1102 = vunpack.c.l.b16 %v1006
    %v1103 = vunpack.c.l.b16 %v1007
    %v1104 = vunpack.c.l.b16 %v1008
    %v1105 = vunpack.c.l.b16 %v1009
    %v1106 = vunpack.c.l.b16 %v1010
    %v1107 = vunpack.c.l.b16 %v1011
    %v1108 = vunpack.c.l.b16 %v1012
    %v1109 = vunpack.c.l.b16 %v1013
    %v1110 = vunpack.c.l.b16 %v1014
    %v1111 = vunpack.c.l.b16 %v1015
    %v1112 = vunpack.c.l.b16 %v1016
    %v1113 = vunpack.c.l.b16 %v1017
    %v1114 = vunpack.c.l.b16 %v1018
    %v1115 = vunpack.c.l.b16 %v1019
    %v1116 = vunpack.c.l.b16 %v1020
    %v1117 = vunpack.c.l.b16 %v1021
    %v1118 = vunpack.c.l.b16 %v1022
    %v1119 = vunpack.c.l.b16 %v1023
    %v1120 = vunpack.c.l.b16 %v1024
    %v1121 = vunpack.c.l.b16 %v1025
    %v1122 = vunpack.c.l.b16 %v1026
    %v1123 = vunpack.c.l.b16 %v1027
    %v1124 = vunpack.c.l.b16 %v1028
    %v1125 = vunpack.c.l.b16 %v1029
    %v1126 = vunpack.c.l.b16 %v1030
    %v1127 = vunpack.c.l.b16 %v1031
    %v1128 = vunpack.c.l.b16 %v1032
    %v1129 = vunpack.c.l.b16 %v1033
    %v1130 = vunpack.c.l.b16 %v1034
    %v1131 = vunpack.c.l.b16 %v1035
    %v1132 = vunpack.c.l.b16 %v1036
    %v1133 = vunpack.c.l.b16 %v1037
    %v1134 = vunpack.c.l.b16 %v1038
    %v1135 = vunpack.c.l.b16 %v1039
    %v1136 = vunpack.c.l.b16 %v1040
    %v1137 = vunpack.c.l.b16 %v1041
    %v1138 = vunpack.c.l.b16 %v1042
    %v1139 = vunpack.c.l.b16 %v1043
    %v1140 = vunpack.c.l.b16 %v1044
    %v1141 = vunpack.c.l.b16 %v1045
    %v1142 = vunpack.c.l.b16 %v1046
    %v1143 = vunpack.c.l.b16 %v1047
    %v1144 = vunpack.c.l.b16 %v1048
    %v1145 = vunpack.c.l.b16 %v1049
    %v1146 = vpack.c.b16 %v1099, %v1098
    %v1147 = vpack.c.b16 %v1101, %v1100
    %v1148 = vpack.c.b16 %v1103, %v1102
    %v1149 = vpack.c.b16 %v1105, %v1104
    %v1150 = vpack.c.b16 %v1107, %v1106
    %v1151 = vpack.c.b16 %v1109, %v1108
    %v1152 = vpack.c.b16 %v1111, %v1110
    %v1153 = vpack.c.b16 %v1113, %v1112
    %v1154 = vpack.c.b16 %v1115, %v1114
    %v1155 = vpack.c.b16 %v1117, %v1116
    %v1156 = vpack.c.b16 %v1119, %v1118
    %v1157 = vpack.c.b16 %v1121, %v1120
    %v1158 = vpack.c.b16 %v1123, %v1122
    %v1159 = vpack.c.b16 %v1125, %v1124
    %v1160 = vpack.c.b16 %v1127, %v1126
    %v1161 = vpack.c.b16 %v1129, %v1128
    %v1162 = vpack.c.b16 %v1131, %v1130
    %v1163 = vpack.c.b16 %v1133, %v1132
    %v1164 = vpack.c.b16 %v1135, %v1134
    %v1165 = vpack.c.b16 %v1137, %v1136
    %v1166 = vpack.c.b16 %v1139, %v1138
    %v1167 = vpack.c.b16 %v1141, %v1140
    %v1168 = vpack.c.b16 %v1143, %v1142
    %v1169 = vpack.c.b16 %v1145, %v1144
    %1194 = vmatprep.subr.bf16.mxu0 0
    %1195 = vmatpush1.bf16.msra.mxu0 %v1146
    %1196 = vmatprep.subr.bf16.mxu0 0
    %1197 = vmatpush1.bf16.msra.mxu0 %v1147
    %1198 = vmatprep.subr.bf16.mxu0 0
    %1199 = vmatpush1.bf16.msra.mxu0 %v1148
    %1200 = vmatprep.subr.bf16.mxu0 0
    %1201 = vmatpush1.bf16.msra.mxu0 %v1149
    %1202 = vmatprep.subr.bf16.mxu0 0
    %1203 = vmatpush1.bf16.msra.mxu0 %v1150
    %1204 = vmatprep.subr.bf16.mxu0 0
    %1205 = vmatpush1.bf16.msra.mxu0 %v1151
    %1206 = vmatprep.subr.bf16.mxu0 0
    %1207 = vmatpush1.bf16.msra.mxu0 %v1152
    %1208 = vmatprep.subr.bf16.mxu0 0
    %1209 = vmatpush1.bf16.msra.mxu0 %v1153
    %1210 = vmatprep.subr.bf16.mxu0 0
    %1211 = vmatpush1.bf16.msra.mxu0 %v1154
    %1212 = vmatprep.subr.bf16.mxu0 0
    %1213 = vmatpush1.bf16.msra.mxu0 %v1155
    %1214 = vmatprep.subr.bf16.mxu0 0
    %1215 = vmatpush1.bf16.msra.mxu0 %v1156
    %1216 = vmatprep.subr.bf16.mxu0 0
    %1217 = vmatpush1.bf16.msra.mxu0 %v1157
    %1218 = vmatprep.subr.bf16.mxu0 0
    %1219 = vmatpush1.bf16.msra.mxu0 %v1158
    %1220 = vmatprep.subr.bf16.mxu0 0
    %1221 = vmatpush1.bf16.msra.mxu0 %v1159
    %1222 = vmatprep.subr.bf16.mxu0 0
    %1223 = vmatpush1.bf16.msra.mxu0 %v1160
    %1224 = vmatprep.subr.bf16.mxu0 0
    %1225 = vmatpush1.bf16.msra.mxu0 %v1161
    %1226 = vmatprep.mubr.bf16.mxu0 %v666
    %1227 = vmatmul.mubr.bf16.gmra.mrb[0].mxu0 %v354
    %v1228 = vpop.f32.mrb[0].mxu0
    %v1229 = vadd.f32 0.0, %v1228
    %v1230 = vpop.f32.mrb[0].mxu0
    %v1231 = vpop.f32.mrb[0].mxu0
    %v1232 = vadd.f32 0.0, %v1231
    %v1233 = vpop.f32.mrb[0].mxu0
    %1234 = vmatprep.mubr.bf16.mxu0 %v667
    %1235 = vmatmul.mubr.bf16.gmra.mrb[0].mxu0 %v355
    %v1236 = vpop.f32.mrb[0].mxu0
    %v1237 = vpop.f32.mrb[0].mxu0
    %v1238 = vpop.f32.mrb[0].mxu0
    %v1239 = vadd.f32 0.0, %v1238
    %v1240 = vpop.f32.mrb[0].mxu0
    %1241 = vmatprep.mubr.bf16.mxu0 %v668
    %1242 = vmatmul.mubr.bf16.gmra.mrb[0].mxu0 %v356
    %v1243 = vpop.f32.mrb[0].mxu0
    %v1244 = vadd.f32 0.0, %v1243
    %v1245 = vpop.f32.mrb[0].mxu0
    %v1246 = vpop.f32.mrb[0].mxu0
    %v1247 = vpop.f32.mrb[0].mxu0
    %1248 = vmatprep.mubr.bf16.mxu0 %v669
    %1249 = vmatmul.mubr.bf16.gmra.mrb[0].mxu0 %v357
    %v1250 = vpop.f32.mrb[0].mxu0
    %v1251 = vadd.f32 0.0, %v1250
    %v1252 = vpop.f32.mrb[0].mxu0
    %v1253 = vpop.f32.mrb[0].mxu0
    %v1254 = vadd.f32 0.0, %v1253
    %v1255 = vpop.f32.mrb[0].mxu0
    %1256 = vmatprep.mubr.bf16.mxu0 %v670
    %1257 = vmatmul.mubr.bf16.gmra.mrb[0].mxu0 %v358
    %v1258 = vpop.f32.mrb[0].mxu0
    %v1259 = vpop.f32.mrb[0].mxu0
    %v1260 = vpop.f32.mrb[0].mxu0
    %v1261 = vadd.f32 0.0, %v1260
    %v1262 = vpop.f32.mrb[0].mxu0
    %1263 = vmatprep.mubr.bf16.mxu0 %v671
    %1264 = vmatmul.mubr.bf16.gmra.mrb[0].mxu0 %v359
    %v1265 = vpop.f32.mrb[0].mxu0
    %v1266 = vadd.f32 0.0, %v1265
    %v1267 = vpop.f32.mrb[0].mxu0
    %v1268 = vpop.f32.mrb[0].mxu0
    %v1269 = vpop.f32.mrb[0].mxu0
    %1270 = vmatprep.mubr.bf16.mxu0 %v672
    %1271 = vmatmul.mubr.bf16.gmra.mrb[0].mxu0 %v360
    %v1272 = vpop.f32.mrb[0].mxu0
    %v1273 = vadd.f32 0.0, %v1272
    %v1274 = vpop.f32.mrb[0].mxu0
    %v1275 = vpop.f32.mrb[0].mxu0
    %v1276 = vadd.f32 0.0, %v1275
    %v1277 = vpop.f32.mrb[0].mxu0
    %1278 = vmatprep.mubr.bf16.mxu0 %v673
    %1279 = vmatmul.mubr.bf16.gmra.mrb[0].mxu0 %v361
    %v1280 = vpop.f32.mrb[0].mxu0
    %v1281 = vpop.f32.mrb[0].mxu0
    %v1282 = vpop.f32.mrb[0].mxu0
    %v1283 = vadd.f32 0.0, %v1282
    %v1284 = vpop.f32.mrb[0].mxu0
    %1285 = vmatprep.mubr.bf16.mxu0 %v674
    %1286 = vmatmul.mubr.bf16.gmra.mrb[0].mxu0 %v362
    %v1287 = vpop.f32.mrb[0].mxu0
    %v1288 = vadd.f32 0.0, %v1287
    %v1289 = vpop.f32.mrb[0].mxu0
    %v1290 = vpop.f32.mrb[0].mxu0
    %v1291 = vpop.f32.mrb[0].mxu0
    %1292 = vmatprep.mubr.bf16.mxu0 %v675
    %1293 = vmatmul.mubr.bf16.gmra.mrb[0].mxu0 %v363
    %v1294 = vpop.f32.mrb[0].mxu0
    %v1295 = vadd.f32 0.0, %v1294
    %v1296 = vpop.f32.mrb[0].mxu0
    %v1297 = vpop.f32.mrb[0].mxu0
    %v1298 = vadd.f32 0.0, %v1297
    %v1299 = vpop.f32.mrb[0].mxu0
    %1300 = vmatprep.mubr.bf16.mxu0 %v676
    %1301 = vmatmul.mubr.bf16.gmra.mrb[0].mxu0 %v364
    %v1302 = vpop.f32.mrb[0].mxu0
    %v1303 = vpop.f32.mrb[0].mxu0
    %v1304 = vpop.f32.mrb[0].mxu0
    %v1305 = vadd.f32 0.0, %v1304
    %v1306 = vpop.f32.mrb[0].mxu0
    %1307 = vmatprep.mubr.bf16.mxu0 %v677
    %1308 = vmatmul.mubr.bf16.gmra.mrb[0].mxu0 %v365
    %v1309 = vpop.f32.mrb[0].mxu0
    %v1310 = vadd.f32 0.0, %v1309
    %v1311 = vpop.f32.mrb[0].mxu0
    %v1312 = vpop.f32.mrb[0].mxu0
    %v1313 = vpop.f32.mrb[0].mxu0
    %1314 = vmatprep.mubr.bf16.mxu0 %v678
    %1315 = vmatmul.mubr.bf16.gmra.mrb[0].mxu0 %v366
    %v1316 = vpop.f32.mrb[0].mxu0
    %v1317 = vadd.f32 0.0, %v1316
    %v1318 = vpop.f32.mrb[0].mxu0
    %v1319 = vpop.f32.mrb[0].mxu0
    %v1320 = vadd.f32 0.0, %v1319
    %v1321 = vpop.f32.mrb[0].mxu0
    %1322 = vmatprep.mubr.bf16.mxu0 %v679
    %1323 = vmatmul.mubr.bf16.gmra.mrb[0].mxu0 %v367
    %v1324 = vpop.f32.mrb[0].mxu0
    %v1325 = vpop.f32.mrb[0].mxu0
    %v1326 = vpop.f32.mrb[0].mxu0
    %v1327 = vadd.f32 0.0, %v1326
    %v1328 = vpop.f32.mrb[0].mxu0
    %1329 = vmatprep.mubr.bf16.mxu0 %v680
    %1330 = vmatmul.mubr.bf16.gmra.mrb[0].mxu0 %v368
    %v1331 = vpop.f32.mrb[0].mxu0
    %v1332 = vadd.f32 0.0, %v1331
    %v1333 = vpop.f32.mrb[0].mxu0
    %v1334 = vpop.f32.mrb[0].mxu0
    %v1335 = vpop.f32.mrb[0].mxu0
    %1336 = vmatprep.mubr.bf16.mxu0 %v681
    %1337 = vmatmul.mubr.bf16.gmra.mrb[0].mxu0 %v369
    %v1338 = vpop.f32.mrb[0].mxu0
    %v1339 = vadd.f32 0.0, %v1338
    %v1340 = vpop.f32.mrb[0].mxu0
    %v1341 = vpop.f32.mrb[0].mxu0
    %v1342 = vadd.f32 0.0, %v1341
    %v1343 = vpop.f32.mrb[0].mxu0
    %1344 = vmatprep.mubr.bf16.mxu0 %v682
    %1345 = vmatmul.mubr.bf16.gmra.mrb[0].mxu0 %v370
    %v1346 = vpop.f32.mrb[0].mxu0
    %v1347 = vpop.f32.mrb[0].mxu0
    %v1348 = vpop.f32.mrb[0].mxu0
    %v1349 = vadd.f32 0.0, %v1348
    %v1350 = vpop.f32.mrb[0].mxu0
    %1351 = vmatprep.mubr.bf16.mxu0 %v683
    %1352 = vmatmul.mubr.bf16.gmra.mrb[0].mxu0 %v371
    %v1353 = vpop.f32.mrb[0].mxu0
    %v1354 = vadd.f32 0.0, %v1353
    %v1355 = vpop.f32.mrb[0].mxu0
    %v1356 = vpop.f32.mrb[0].mxu0
    %v1357 = vpop.f32.mrb[0].mxu0
    %1358 = vmatprep.mubr.bf16.mxu0 %v684
    %1359 = vmatmul.mubr.bf16.gmra.mrb[0].mxu0 %v372
    %v1360 = vpop.f32.mrb[0].mxu0
    %v1361 = vadd.f32 0.0, %v1360
    %v1362 = vpop.f32.mrb[0].mxu0
    %v1363 = vpop.f32.mrb[0].mxu0
    %v1364 = vadd.f32 0.0, %v1363
    %v1365 = vpop.f32.mrb[0].mxu0
    %1366 = vmatprep.mubr.bf16.mxu0 %v685
    %1367 = vmatmul.mubr.bf16.gmra.mrb[0].mxu0 %v373
    %v1368 = vpop.f32.mrb[0].mxu0
    %v1369 = vpop.f32.mrb[0].mxu0
    %v1370 = vpop.f32.mrb[0].mxu0
    %v1371 = vadd.f32 0.0, %v1370
    %v1372 = vpop.f32.mrb[0].mxu0
    %1373 = vmatprep.mubr.bf16.mxu0 %v686
    %1374 = vmatmul.mubr.bf16.gmra.mrb[0].mxu0 %v374
    %v1375 = vpop.f32.mrb[0].mxu0
    %v1376 = vadd.f32 0.0, %v1375
    %v1377 = vpop.f32.mrb[0].mxu0
    %v1378 = vpop.f32.mrb[0].mxu0
    %v1379 = vpop.f32.mrb[0].mxu0
    %1380 = vmatprep.mubr.bf16.mxu0 %v687
    %1381 = vmatmul.mubr.bf16.gmra.mrb[0].mxu0 %v375
    %v1382 = vpop.f32.mrb[0].mxu0
    %v1383 = vadd.f32 0.0, %v1382
    %v1384 = vpop.f32.mrb[0].mxu0
    %v1385 = vpop.f32.mrb[0].mxu0
    %v1386 = vadd.f32 0.0, %v1385
    %v1387 = vpop.f32.mrb[0].mxu0
    %1388 = vmatprep.mubr.bf16.mxu0 %v688
    %1389 = vmatmul.mubr.bf16.gmra.mrb[0].mxu0 %v376
    %v1390 = vpop.f32.mrb[0].mxu0
    %v1391 = vpop.f32.mrb[0].mxu0
    %v1392 = vpop.f32.mrb[0].mxu0
    %v1393 = vadd.f32 0.0, %v1392
    %v1394 = vpop.f32.mrb[0].mxu0
    %1395 = vmatprep.mubr.bf16.mxu0 %v689
    %1396 = vmatmul.mubr.bf16.gmra.mrb[0].mxu0 %v377
    %v1397 = vpop.f32.mrb[0].mxu0
    %v1398 = vadd.f32 0.0, %v1397
    %v1399 = vpop.f32.mrb[0].mxu0
    %v1400 = vpop.f32.mrb[0].mxu0
    %v1401 = vpop.f32.mrb[0].mxu0
    %1402 = vdwg.mxu0
    %1403 = vmatprep.subr.bf16.mxu0 0
    %1404 = vmatpush1.bf16.msra.mxu0 %v1162
    %1405 = vmatprep.subr.bf16.mxu0 0
    %1406 = vmatpush1.bf16.msra.mxu0 %v1163
    %1407 = vmatprep.subr.bf16.mxu0 0
    %1408 = vmatpush1.bf16.msra.mxu0 %v1164
    %1409 = vmatprep.subr.bf16.mxu0 0
    %1410 = vmatpush1.bf16.msra.mxu0 %v1165
    %1411 = vmatprep.subr.bf16.mxu0 0
    %1412 = vmatpush1.bf16.msra.mxu0 %v1166
    %1413 = vmatprep.subr.bf16.mxu0 0
    %1414 = vmatpush1.bf16.msra.mxu0 %v1167
    %1415 = vmatprep.subr.bf16.mxu0 0
    %1416 = vmatpush1.bf16.msra.mxu0 %v1168
    %1417 = vmatprep.subr.bf16.mxu0 0
    %1418 = vmatpush1.bf16.msra.mxu0 %v1169
    %1419 = vmatprep.subr.bf16.mxu0 0
    %1420 = vmatpush1.bf16.msra.mxu0 0
    %1421 = vmatprep.subr.bf16.mxu0 0
    %1422 = vmatpush1.bf16.msra.mxu0 0
    %1423 = vmatprep.subr.bf16.mxu0 0
    %1424 = vmatpush1.bf16.msra.mxu0 0
    %1425 = vmatprep.subr.bf16.mxu0 0
    %1426 = vmatpush1.bf16.msra.mxu0 0
    %1427 = vmatprep.subr.bf16.mxu0 0
    %1428 = vmatpush1.bf16.msra.mxu0 0
    %1429 = vmatprep.subr.bf16.mxu0 0
    %1430 = vmatpush1.bf16.msra.mxu0 0
    %1431 = vmatprep.subr.bf16.mxu0 0
    %1432 = vmatpush1.bf16.msra.mxu0 0
    %1433 = vmatprep.subr.bf16.mxu0 0
    %1434 = vmatpush1.bf16.msra.mxu0 0
    %1435 = vmatprep.mubr.bf16.mxu0 0
    %1436 = vmatmul.mubr.bf16.gmra.mrb[0].mxu0 %v978
    %v1437 = vpop.f32.mrb[0].mxu0
    %v1438 = vadd.f32 %v1229, %v1437
    %v1439 = vpop.f32.mrb[0].mxu0
    %v1440 = vpop.f32.mrb[0].mxu0
    %v1441 = vadd.f32 %v1232, %v1440
    %v1442 = vpop.f32.mrb[0].mxu0
    %1443 = vmatprep.mubr.bf16.mxu0 0
    %1444 = vmatmul.mubr.bf16.gmra.mrb[0].mxu0 %v979
    %v1445 = vpop.f32.mrb[0].mxu0
    %v1446 = vpop.f32.mrb[0].mxu0
    %v1447 = vpop.f32.mrb[0].mxu0
    %v1448 = vadd.f32 %v1239, %v1447
    %v1449 = vpop.f32.mrb[0].mxu0
    %1450 = vmatprep.mubr.bf16.mxu0 0
    %1451 = vmatmul.mubr.bf16.gmra.mrb[0].mxu0 %v980
    %v1452 = vpop.f32.mrb[0].mxu0
    %v1453 = vadd.f32 %v1244, %v1452
    %v1454 = vpop.f32.mrb[0].mxu0
    %v1455 = vpop.f32.mrb[0].mxu0
    %v1456 = vpop.f32.mrb[0].mxu0
    %1457 = vmatprep.mubr.bf16.mxu0 0
    %1458 = vmatmul.mubr.bf16.gmra.mrb[0].mxu0 %v981
    %v1459 = vpop.f32.mrb[0].mxu0
    %v1460 = vadd.f32 %v1251, %v1459
    %v1461 = vpop.f32.mrb[0].mxu0
    %v1462 = vpop.f32.mrb[0].mxu0
    %v1463 = vadd.f32 %v1254, %v1462
    %v1464 = vpop.f32.mrb[0].mxu0
    %1465 = vmatprep.mubr.bf16.mxu0 0
    %1466 = vmatmul.mubr.bf16.gmra.mrb[0].mxu0 %v982
    %v1467 = vpop.f32.mrb[0].mxu0
    %v1468 = vpop.f32.mrb[0].mxu0
    %v1469 = vpop.f32.mrb[0].mxu0
    %v1470 = vadd.f32 %v1261, %v1469
    %v1471 = vpop.f32.mrb[0].mxu0
    %1472 = vmatprep.mubr.bf16.mxu0 0
    %1473 = vmatmul.mubr.bf16.gmra.mrb[0].mxu0 %v983
    %v1474 = vpop.f32.mrb[0].mxu0
    %v1475 = vadd.f32 %v1266, %v1474
    %v1476 = vpop.f32.mrb[0].mxu0
    %v1477 = vpop.f32.mrb[0].mxu0
    %v1478 = vpop.f32.mrb[0].mxu0
    %1479 = vmatprep.mubr.bf16.mxu0 0
    %1480 = vmatmul.mubr.bf16.gmra.mrb[0].mxu0 %v984
    %v1481 = vpop.f32.mrb[0].mxu0
    %v1482 = vadd.f32 %v1273, %v1481
    %v1483 = vpop.f32.mrb[0].mxu0
    %v1484 = vpop.f32.mrb[0].mxu0
    %v1485 = vadd.f32 %v1276, %v1484
    %v1486 = vpop.f32.mrb[0].mxu0
    %1487 = vmatprep.mubr.bf16.mxu0 0
    %1488 = vmatmul.mubr.bf16.gmra.mrb[0].mxu0 %v985
    %v1489 = vpop.f32.mrb[0].mxu0
    %v1490 = vpop.f32.mrb[0].mxu0
    %v1491 = vpop.f32.mrb[0].mxu0
    %v1492 = vadd.f32 %v1283, %v1491
    %v1493 = vpop.f32.mrb[0].mxu0
    %1494 = vmatprep.mubr.bf16.mxu0 0
    %1495 = vmatmul.mubr.bf16.gmra.mrb[0].mxu0 %v986
    %v1496 = vpop.f32.mrb[0].mxu0
    %v1497 = vadd.f32 %v1288, %v1496
    %v1498 = vpop.f32.mrb[0].mxu0
    %v1499 = vpop.f32.mrb[0].mxu0
    %v1500 = vpop.f32.mrb[0].mxu0
    %1501 = vmatprep.mubr.bf16.mxu0 0
    %1502 = vmatmul.mubr.bf16.gmra.mrb[0].mxu0 %v987
    %v1503 = vpop.f32.mrb[0].mxu0
    %v1504 = vadd.f32 %v1295, %v1503
    %v1505 = vpop.f32.mrb[0].mxu0
    %v1506 = vpop.f32.mrb[0].mxu0
    %v1507 = vadd.f32 %v1298, %v1506
    %v1508 = vpop.f32.mrb[0].mxu0
    %1509 = vmatprep.mubr.bf16.mxu0 0
    %1510 = vmatmul.mubr.bf16.gmra.mrb[0].mxu0 %v988
    %v1511 = vpop.f32.mrb[0].mxu0
    %v1512 = vpop.f32.mrb[0].mxu0
    %v1513 = vpop.f32.mrb[0].mxu0
    %v1514 = vadd.f32 %v1305, %v1513
    %v1515 = vpop.f32.mrb[0].mxu0
    %1516 = vmatprep.mubr.bf16.mxu0 0
    %1517 = vmatmul.mubr.bf16.gmra.mrb[0].mxu0 %v989
    %v1518 = vpop.f32.mrb[0].mxu0
    %v1519 = vadd.f32 %v1310, %v1518
    %v1520 = vpop.f32.mrb[0].mxu0
    %v1521 = vpop.f32.mrb[0].mxu0
    %v1522 = vpop.f32.mrb[0].mxu0
    %1523 = vmatprep.mubr.bf16.mxu0 0
    %1524 = vmatmul.mubr.bf16.gmra.mrb[0].mxu0 %v990
    %v1525 = vpop.f32.mrb[0].mxu0
    %v1526 = vadd.f32 %v1317, %v1525
    %v1527 = vpop.f32.mrb[0].mxu0
    %v1528 = vpop.f32.mrb[0].mxu0
    %v1529 = vadd.f32 %v1320, %v1528
    %v1530 = vpop.f32.mrb[0].mxu0
    %1531 = vmatprep.mubr.bf16.mxu0 0
    %1532 = vmatmul.mubr.bf16.gmra.mrb[0].mxu0 %v991
    %v1533 = vpop.f32.mrb[0].mxu0
    %v1534 = vpop.f32.mrb[0].mxu0
    %v1535 = vpop.f32.mrb[0].mxu0
    %v1536 = vadd.f32 %v1327, %v1535
    %v1537 = vpop.f32.mrb[0].mxu0
    %1538 = vmatprep.mubr.bf16.mxu0 0
    %1539 = vmatmul.mubr.bf16.gmra.mrb[0].mxu0 %v992
    %v1540 = vpop.f32.mrb[0].mxu0
    %v1541 = vadd.f32 %v1332, %v1540
    %v1542 = vpop.f32.mrb[0].mxu0
    %v1543 = vpop.f32.mrb[0].mxu0
    %v1544 = vpop.f32.mrb[0].mxu0
    %1545 = vmatprep.mubr.bf16.mxu0 0
    %1546 = vmatmul.mubr.bf16.gmra.mrb[0].mxu0 %v993
    %v1547 = vpop.f32.mrb[0].mxu0
    %v1548 = vadd.f32 %v1339, %v1547
    %v1549 = vpop.f32.mrb[0].mxu0
    %v1550 = vpop.f32.mrb[0].mxu0
    %v1551 = vadd.f32 %v1342, %v1550
    %v1552 = vpop.f32.mrb[0].mxu0
    %1553 = vmatprep.mubr.bf16.mxu0 0
    %1554 = vmatmul.mubr.bf16.gmra.mrb[0].mxu0 %v994
    %v1555 = vpop.f32.mrb[0].mxu0
    %v1556 = vpop.f32.mrb[0].mxu0
    %v1557 = vpop.f32.mrb[0].mxu0
    %v1558 = vadd.f32 %v1349, %v1557
    %v1559 = vpop.f32.mrb[0].mxu0
    %1560 = vmatprep.mubr.bf16.mxu0 0
    %1561 = vmatmul.mubr.bf16.gmra.mrb[0].mxu0 %v995
    %v1562 = vpop.f32.mrb[0].mxu0
    %v1563 = vadd.f32 %v1354, %v1562
    %v1564 = vpop.f32.mrb[0].mxu0
    %v1565 = vpop.f32.mrb[0].mxu0
    %v1566 = vpop.f32.mrb[0].mxu0
    %1567 = vmatprep.mubr.bf16.mxu0 0
    %1568 = vmatmul.mubr.bf16.gmra.mrb[0].mxu0 %v996
    %v1569 = vpop.f32.mrb[0].mxu0
    %v1570 = vadd.f32 %v1361, %v1569
    %v1571 = vpop.f32.mrb[0].mxu0
    %v1572 = vpop.f32.mrb[0].mxu0
    %v1573 = vadd.f32 %v1364, %v1572
    %v1574 = vpop.f32.mrb[0].mxu0
    %1575 = vmatprep.mubr.bf16.mxu0 0
    %1576 = vmatmul.mubr.bf16.gmra.mrb[0].mxu0 %v997
    %v1577 = vpop.f32.mrb[0].mxu0
    %v1578 = vpop.f32.mrb[0].mxu0
    %v1579 = vpop.f32.mrb[0].mxu0
    %v1580 = vadd.f32 %v1371, %v1579
    %v1581 = vpop.f32.mrb[0].mxu0
    %1582 = vmatprep.mubr.bf16.mxu0 0
    %1583 = vmatmul.mubr.bf16.gmra.mrb[0].mxu0 %v998
    %v1584 = vpop.f32.mrb[0].mxu0
    %v1585 = vadd.f32 %v1376, %v1584
    %v1586 = vpop.f32.mrb[0].mxu0
    %v1587 = vpop.f32.mrb[0].mxu0
    %v1588 = vpop.f32.mrb[0].mxu0
    %1589 = vmatprep.mubr.bf16.mxu0 0
    %1590 = vmatmul.mubr.bf16.gmra.mrb[0].mxu0 %v999
    %v1591 = vpop.f32.mrb[0].mxu0
    %v1592 = vadd.f32 %v1383, %v1591
    %v1593 = vpop.f32.mrb[0].mxu0
    %v1594 = vpop.f32.mrb[0].mxu0
    %v1595 = vadd.f32 %v1386, %v1594
    %v1596 = vpop.f32.mrb[0].mxu0
    %1597 = vmatprep.mubr.bf16.mxu0 0
    %1598 = vmatmul.mubr.bf16.gmra.mrb[0].mxu0 %v1000
    %v1599 = vpop.f32.mrb[0].mxu0
    %v1600 = vpop.f32.mrb[0].mxu0
    %v1601 = vpop.f32.mrb[0].mxu0
    %v1602 = vadd.f32 %v1393, %v1601
    %v1603 = vpop.f32.mrb[0].mxu0
    %1604 = vmatprep.mubr.bf16.mxu0 0
    %1605 = vmatmul.mubr.bf16.gmra.mrb[0].mxu0 %v1001
    %v1606 = vpop.f32.mrb[0].mxu0
    %v1607 = vadd.f32 %v1398, %v1606
    %v1608 = vpop.f32.mrb[0].mxu0
    %v1609 = vpop.f32.mrb[0].mxu0
    %v1610 = vpop.f32.mrb[0].mxu0
    %1611 = vdwg.mxu0
    %v1612 = vmax.f32 %v1438, %v1441
    %v1613 = vrot.slane %v1612, 4
    %v1614 = vmax.f32 %v1612, %v1613
    %v1615 = vrot.slane %v1614, 2
    %v1616 = vmax.f32 %v1614, %v1615
    %v1617 = vrot.slane %v1616, 1
    %v1618 = vmax.f32 %v1616, %v1617
    %v1619 = vmax.f32 %v1448, %v1453
    %v1620 = vrot.slane %v1619, 4
    %v1621 = vmax.f32 %v1619, %v1620
    %v1622 = vrot.slane %v1621, 2
    %v1623 = vmax.f32 %v1621, %v1622
    %v1624 = vrot.slane %v1623, 1
    %v1625 = vmax.f32 %v1623, %v1624
    %v1626 = vmax.f32 %v1460, %v1463
    %v1627 = vrot.slane %v1626, 4
    %v1628 = vmax.f32 %v1626, %v1627
    %v1629 = vrot.slane %v1628, 2
    %v1630 = vmax.f32 %v1628, %v1629
    %v1631 = vrot.slane %v1630, 1
    %v1632 = vmax.f32 %v1630, %v1631
    %v1633 = vmax.f32 %v1470, %v1475
    %v1634 = vrot.slane %v1633, 4
    %v1635 = vmax.f32 %v1633, %v1634
    %v1636 = vrot.slane %v1635, 2
    %v1637 = vmax.f32 %v1635, %v1636
    %v1638 = vrot.slane %v1637, 1
    %v1639 = vmax.f32 %v1637, %v1638
    %v1640 = vmax.f32 %v1482, %v1485
    %v1641 = vrot.slane %v1640, 4
    %v1642 = vmax.f32 %v1640, %v1641
    %v1643 = vrot.slane %v1642, 2
    %v1644 = vmax.f32 %v1642, %v1643
    %v1645 = vrot.slane %v1644, 1
    %v1646 = vmax.f32 %v1644, %v1645
    %v1647 = vmax.f32 %v1492, %v1497
    %v1648 = vrot.slane %v1647, 4
    %v1649 = vmax.f32 %v1647, %v1648
    %v1650 = vrot.slane %v1649, 2
    %v1651 = vmax.f32 %v1649, %v1650
    %v1652 = vrot.slane %v1651, 1
    %v1653 = vmax.f32 %v1651, %v1652
    %v1654 = vmax.f32 %v1504, %v1507
    %v1655 = vrot.slane %v1654, 4
    %v1656 = vmax.f32 %v1654, %v1655
    %v1657 = vrot.slane %v1656, 2
    %v1658 = vmax.f32 %v1656, %v1657
    %v1659 = vrot.slane %v1658, 1
    %v1660 = vmax.f32 %v1658, %v1659
    %v1661 = vmax.f32 %v1514, %v1519
    %v1662 = vrot.slane %v1661, 4
    %v1663 = vmax.f32 %v1661, %v1662
    %v1664 = vrot.slane %v1663, 2
    %v1665 = vmax.f32 %v1663, %v1664
    %v1666 = vrot.slane %v1665, 1
    %v1667 = vmax.f32 %v1665, %v1666
    %v1668 = vmax.f32 %v1526, %v1529
    %v1669 = vrot.slane %v1668, 4
    %v1670 = vmax.f32 %v1668, %v1669
    %v1671 = vrot.slane %v1670, 2
    %v1672 = vmax.f32 %v1670, %v1671
    %v1673 = vrot.slane %v1672, 1
    %v1674 = vmax.f32 %v1672, %v1673
    %v1675 = vmax.f32 %v1536, %v1541
    %v1676 = vrot.slane %v1675, 4
    %v1677 = vmax.f32 %v1675, %v1676
    %v1678 = vrot.slane %v1677, 2
    %v1679 = vmax.f32 %v1677, %v1678
    %v1680 = vrot.slane %v1679, 1
    %v1681 = vmax.f32 %v1679, %v1680
    %v1682 = vmax.f32 %v1548, %v1551
    %v1683 = vrot.slane %v1682, 4
    %v1684 = vmax.f32 %v1682, %v1683
    %v1685 = vrot.slane %v1684, 2
    %v1686 = vmax.f32 %v1684, %v1685
    %v1687 = vrot.slane %v1686, 1
    %v1688 = vmax.f32 %v1686, %v1687
    %v1689 = vmax.f32 %v1558, %v1563
    %v1690 = vrot.slane %v1689, 4
    %v1691 = vmax.f32 %v1689, %v1690
    %v1692 = vrot.slane %v1691, 2
    %v1693 = vmax.f32 %v1691, %v1692
    %v1694 = vrot.slane %v1693, 1
    %v1695 = vmax.f32 %v1693, %v1694
    %v1696 = vmax.f32 %v1570, %v1573
    %v1697 = vrot.slane %v1696, 4
    %v1698 = vmax.f32 %v1696, %v1697
    %v1699 = vrot.slane %v1698, 2
    %v1700 = vmax.f32 %v1698, %v1699
    %v1701 = vrot.slane %v1700, 1
    %v1702 = vmax.f32 %v1700, %v1701
    %v1703 = vmax.f32 %v1580, %v1585
    %v1704 = vrot.slane %v1703, 4
    %v1705 = vmax.f32 %v1703, %v1704
    %v1706 = vrot.slane %v1705, 2
    %v1707 = vmax.f32 %v1705, %v1706
    %v1708 = vrot.slane %v1707, 1
    %v1709 = vmax.f32 %v1707, %v1708
    %v1710 = vmax.f32 %v1592, %v1595
    %v1711 = vrot.slane %v1710, 4
    %v1712 = vmax.f32 %v1710, %v1711
    %v1713 = vrot.slane %v1712, 2
    %v1714 = vmax.f32 %v1712, %v1713
    %v1715 = vrot.slane %v1714, 1
    %v1716 = vmax.f32 %v1714, %v1715
    %v1717 = vmax.f32 %v1602, %v1607
    %v1718 = vrot.slane %v1717, 4
    %v1719 = vmax.f32 %v1717, %v1718
    %v1720 = vrot.slane %v1719, 2
    %v1721 = vmax.f32 %v1719, %v1720
    %v1722 = vrot.slane %v1721, 1
    %v1723 = vmax.f32 %v1721, %v1722
    %v1724 = vld [vmem:[%s2] sm:$0x1]
    %v1726 = vlaneseq
    %v1727 = vshrl.u32 %v1726, 7
    %v1728 = vsub.s32 0, %v1727
    %v1729 = vrot.slane %v1724, %v1728
    %v1731 = vadd.f32 %v1618, %v1729
    %v1732 = vadd.f32 %v1625, %v1729
    %v1733 = vadd.f32 %v1632, %v1729
    %v1734 = vadd.f32 %v1639, %v1729
    %v1735 = vadd.f32 %v1646, %v1729
    %v1736 = vadd.f32 %v1653, %v1729
    %v1737 = vadd.f32 %v1660, %v1729
    %v1738 = vadd.f32 %v1667, %v1729
    %v1739 = vadd.f32 %v1674, %v1729
    %v1740 = vadd.f32 %v1681, %v1729
    %v1741 = vadd.f32 %v1688, %v1729
    %v1742 = vadd.f32 %v1695, %v1729
    %v1743 = vadd.f32 %v1702, %v1729
    %v1744 = vadd.f32 %v1709, %v1729
    %v1745 = vadd.f32 %v1716, %v1729
    %v1746 = vadd.f32 %v1723, %v1729
    %v1763 = vrot.slane %v1732, 7
    %vm1764 = vcmask 1041409
    %v1765 = vsel %vm1764, %v1763, %v1731
    %v1766 = vrot.slane %v1733, 6
    %vm1767 = vcmask 1042434
    %v1768 = vsel %vm1767, %v1766, %v1765
    %v1769 = vrot.slane %v1734, 5
    %vm1770 = vcmask 1043459
    %v1771 = vsel %vm1770, %v1769, %v1768
    %v1772 = vrot.slane %v1735, 4
    %vm1773 = vcmask 1044484
    %v1774 = vsel %vm1773, %v1772, %v1771
    %v1775 = vrot.slane %v1736, 3
    %vm1776 = vcmask 1045509
    %v1777 = vsel %vm1776, %v1775, %v1774
    %v1778 = vrot.slane %v1737, 2
    %vm1779 = vcmask 1046534
    %v1780 = vsel %vm1779, %v1778, %v1777
    %v1781 = vrot.slane %v1738, 1
    %vm1782 = vcmask 1047559
    %v1783 = vsel %vm1782, %v1781, %v1780
    %v1784 = vrot.slane %v1740, 7
    %v1785 = vsel %vm1764, %v1784, %v1739
    %v1786 = vrot.slane %v1741, 6
    %v1787 = vsel %vm1767, %v1786, %v1785
    %v1788 = vrot.slane %v1742, 5
    %v1789 = vsel %vm1770, %v1788, %v1787
    %v1790 = vrot.slane %v1743, 4
    %v1791 = vsel %vm1773, %v1790, %v1789
    %v1792 = vrot.slane %v1744, 3
    %v1793 = vsel %vm1776, %v1792, %v1791
    %v1794 = vrot.slane %v1745, 2
    %v1795 = vsel %vm1779, %v1794, %v1793
    %v1796 = vrot.slane %v1746, 1
    %v1797 = vsel %vm1782, %v1796, %v1795
    %1800 = vst [vmem:[#allocation2] sm:$0xff] %v1783
    %1801 = vst [vmem:[#allocation2 + $0x8] sm:$0xff] %v1797
    // Predicated region
    $region14: #{tpu_custom_call.1} parent=1 // pred_check
      _
    $region15: #{tpu_custom_call.1} parent=1 // pred_check_branch
      %1803 = sbr.rel (0) target = $region17
    $region16: #{tpu_custom_call.1} parent=1 // pred_region
      %s1805 = ssub.s32 256, 256
      %1806 = vsyncadd [#allocation3], %s1805
      %s1807 = sshll.u32 [#allocation2], 4
      %s1808 = int_to_ptr.vmem [resolvable:$true] %s1807
      %1813 = dma.vmem_to_hbm [thread:$0]  %s1808, 256, %s3, [#allocation3], 128, 128, 8
    $region17: #{tpu_custom_call.1} parent=1 // pred_fallthru
      _
    // Predicated region
    $region18: #{tpu_custom_call.1} parent=1 // pred_check
      _
    $region19: #{tpu_custom_call.1} parent=1 // pred_check_branch
      %1815 = sbr.rel (0) target = $region21
    $region20: #{tpu_custom_call.1} parent=1 // pred_region
      %1816 = dma.done [#allocation3], 256
    $region21: #{tpu_custom_call.1} parent=1 // pred_fallthru
      _
    %1817 = vsyncpa [#allocation3], 1

</llo_original>
